<compile_context>
chip_gen: v7x
topology: tpu7x:2x2x1
jax: 0.10.0
libtpu: 0.0.40
codegen_flags: <defaults>
</compile_context>

<pallas_src>
import numpy as np

import jax
import jax.numpy as jnp
from jax.experimental import pallas as pl
from jax.experimental.pallas import tpu as pltpu


# ---------------------------------------------------------------------------
# bf16 hi/lo helpers (3-pass ~fp32 matmul folded into one MXU call)
# ---------------------------------------------------------------------------

def _split_bf16(x):
    """Split an f32 array into (hi, lo) bf16 parts with x ~= hi + lo."""
    hi = x.astype(jnp.bfloat16)
    lo = (x - hi.astype(jnp.float32)).astype(jnp.bfloat16)
    return hi, lo


def _lhs3(a):
    """A (M, K) f32 -> [A_hi | A_hi | A_lo] (M, 3K) bf16 (left operand)."""
    hi, lo = _split_bf16(a)
    return jnp.concatenate([hi, hi, lo], axis=1)


def _rhs3(b):
    """B (K, N) f32 -> [B_hi ; B_lo ; B_hi] (3K, N) bf16 (right operand).

    [A_hi|A_hi|A_lo] @ [B_hi;B_lo;B_hi] = A_hi@B_hi + A_hi@B_lo + A_lo@B_hi
    ~= A @ B at ~fp32 accuracy; the MXU accumulates the three bf16 passes
    internally (one matmul instead of three matmuls + two f32 adds).
    """
    hi, lo = _split_bf16(b)
    return jnp.concatenate([hi, lo, hi], axis=0)


def _dot(a, b):
    return jnp.dot(a, b, preferred_element_type=jnp.float32)


# ---------------------------------------------------------------------------
# Kernels
# ---------------------------------------------------------------------------

def _ff_kernel_stacked(er_ref, ei_ref, rw_ref, lh_ref, out_ref):
    """Stacked-standard complex matmuls (best for 256-wide MXU, detector<=128).

    Stage 1:  [z_r | z_i] = [x_r | x_i] @ [[fw_r, fw_i], [-fw_i, fw_r]]
              (all modes batched along the M dim: (MC*H, 6W) @ (6W, 2W)).
    Stage 2:  [y_r ; y_i] = [[fh_r, -fh_i], [fh_i, fh_r]] @ [z_r ; z_i]
              (all modes batched along the N dim: (2H, 6H) @ (6H, MC*W)).
    Intensity |y|^2 is accumulated into the resident output block; sqrt on
    the last mode chunk.
    """
    c = pl.program_id(1)

    @pl.when(c == 0)
    def _():
        out_ref[...] = jnp.zeros_like(out_ref)

    xr = er_ref[0]                       # (MC, H, W)
    xi = ei_ref[0]
    mc, h, w = xr.shape
    xr2 = xr.reshape(mc * h, w)
    xi2 = xi.reshape(mc * h, w)

    # Stage 1: single MXU call for all modes.
    xr_hi, xr_lo = _split_bf16(xr2)
    xi_hi, xi_lo = _split_bf16(xi2)
    lhs1 = jnp.concatenate([xr_hi, xi_hi, xr_hi, xi_hi, xr_lo, xi_lo], axis=1)
    z = _dot(lhs1, rw_ref[...])          # (MC*H, 2W) = [z_r | z_i]

    # Stage 2: lay modes out along columns -> full N fill, single MXU call.
    zr_all = jnp.concatenate([z[m * h:(m + 1) * h, :w] for m in range(mc)], axis=1)
    zi_all = jnp.concatenate([z[m * h:(m + 1) * h, w:] for m in range(mc)], axis=1)
    zr_hi, zr_lo = _split_bf16(zr_all)
    zi_hi, zi_lo = _split_bf16(zi_all)
    rhs2 = jnp.concatenate([zr_hi, zi_hi, zr_lo, zi_lo, zr_hi, zi_hi], axis=0)
    y = _dot(lh_ref[...], rhs2)          # (2H, MC*W) = [y_r ; y_i]

    sq = y[:h, :] * y[:h, :] + y[h:, :] * y[h:, :]   # (H, MC*W)
    intensity = sq[:, 0:w]
    for m in range(1, mc):
        intensity = intensity + sq[:, m * w:(m + 1) * w]
    out_ref[0] += intensity

    @pl.when(c == pl.num_programs(1) - 1)
    def _():
        out_ref[0] = jnp.sqrt(out_ref[0])


def _ff_kernel_karatsuba(er_ref, ei_ref, rwr_ref, rwi_ref, rws_ref,
                         lhr_ref, lhi_ref, lhsum_ref, out_ref):
    """Karatsuba complex matmuls (best for 128-wide MXU / detectors >= 256).

    3 real matmuls per complex product (instead of 4); each matmul is a
    single contraction-concatenated bf16 hi/lo MXU call.
    """
    c = pl.program_id(1)

    @pl.when(c == 0)
    def _():
        out_ref[...] = jnp.zeros_like(out_ref)

    xr = er_ref[0]                       # (MC, H, W)
    xi = ei_ref[0]
    mc, h, w = xr.shape
    xr2 = xr.reshape(mc * h, w)
    xi2 = xi.reshape(mc * h, w)

    # Stage 1 (Karatsuba): Z = X @ F_W for all modes at once.
    t1 = _dot(_lhs3(xr2), rwr_ref[...])
    t2 = _dot(_lhs3(xi2), rwi_ref[...])
    t3 = _dot(_lhs3(xr2 + xi2), rws_ref[...])
    zr = t1 - t2
    zi = t3 - t1 - t2

    # Stage 2 (Karatsuba): Y = F_H @ Z per mode; incoherent sum of |Y|^2.
    lhr = lhr_ref[...]
    lhi = lhi_ref[...]
    lhs_sum = lhsum_ref[...]
    intensity = jnp.zeros((h, w), jnp.float32)
    for m in range(mc):
        zr_m = zr[m * h:(m + 1) * h, :]
        zi_m = zi[m * h:(m + 1) * h, :]
        u1 = _dot(lhr, _rhs3(zr_m))
        u2 = _dot(lhi, _rhs3(zi_m))
        u3 = _dot(lhs_sum, _rhs3(zr_m + zi_m))
        yr = u1 - u2
        yi = u3 - u1 - u2
        intensity = intensity + yr * yr + yi * yi
    out_ref[0] += intensity

    @pl.when(c == pl.num_programs(1) - 1)
    def _():
        out_ref[0] = jnp.sqrt(out_ref[0])


# ---------------------------------------------------------------------------
# Host-side preparation
# ---------------------------------------------------------------------------

def _dft_matrix(n):
    """Unnormalized forward DFT matrix F[u, m] = exp(-2*pi*i*u*m/n) as (re, im).

    Computed on host in numpy with int64 phase (no int32 overflow for large n)
    and float64 angles, then cast to f32.
    """
    idx = np.arange(n, dtype=np.int64)
    phase = (idx[:, None] * idx[None, :]) % n
    ang = (-2.0 * np.pi / n) * phase.astype(np.float64)
    return (jnp.asarray(np.cos(ang), dtype=jnp.float32),
            jnp.asarray(np.sin(ang), dtype=jnp.float32))


def _tpu_params():
    """Best-effort (physical_vmem_bytes, mxu_width) for the local chip.

    Conservative fallbacks (64 MiB / 256-wide) if detection fails.
    """
    vmem = 64 * 1024 * 1024
    mxu = 256
    try:
        kind = jax.devices()[0].device_kind.lower()
    except Exception:
        kind = ""
    if any(tag in kind for tag in ("v2", "v3", "v4", "v5")):
        # 128x128 MXU generations (incl. v5e/v5p), 128 MiB VMEM.
        mxu = 128
        vmem = 128 * 1024 * 1024
    elif "v6" in kind:
        mxu = 256
        vmem = 128 * 1024 * 1024
    else:
        # v7x or unknown: 256-wide MXU, 64 MiB VMEM per core (conservative).
        mxu = 256
        vmem = 64 * 1024 * 1024
    try:
        cap = getattr(pltpu.get_tpu_info(), "vmem_capacity_bytes", None)
        if cap:
            vmem = min(vmem, int(cap))
    except Exception:
        pass
    return vmem, mxu


def _pick_mode_chunk(num_modes, budget_bytes, per_mode_bytes):
    """Largest divisor of num_modes whose per-grid-step working set fits."""
    limit = max(1, int(budget_bytes) // int(per_mode_bytes))
    limit = min(limit, 64)               # bound in-kernel unrolling
    best = 1
    for cand in range(1, num_modes + 1):
        if num_modes % cand == 0 and cand <= limit:
            best = cand
    return best


# ---------------------------------------------------------------------------
# Public wrapper (FarfieldAmplitude.forward equivalent)
# ---------------------------------------------------------------------------

def farfield_amplitude(exit_waves_re, exit_waves_im, dpos=None,
                       gradient_mask=None, epoch=(0,),
                       subpixel_optimization_active=lambda epoch: False,
                       mode_chunk=None):
    """JAX/Pallas equivalent of FarfieldAmplitude.forward.

    exit_waves_re / exit_waves_im: (K, M, H, W) float32.
    Returns far-field amplitude of shape (K, H, W) float32.
    """
    if subpixel_optimization_active(epoch[0]):
        # TODO(synk): subpixel-shifted farfield amplitude (uses dpos) not implemented.
        raise NotImplementedError("subpixel branch not implemented")
    del dpos, gradient_mask  # forward-only: gradient_mask affects backward only.

    exit_waves_re = exit_waves_re.astype(jnp.float32)
    exit_waves_im = exit_waves_im.astype(jnp.float32)
    K, M, H, W = exit_waves_re.shape

    vmem_bytes, mxu_width = _tpu_params()
    # Stacked 2-matmul complex form fills a 256-wide MXU when the detector is
    # <=128; Karatsuba (3 matmuls, fewer MACs) wins on 128-wide MXUs (v5e and
    # earlier) and for detectors >= 256.
    use_stacked = (mxu_width >= 256) and (max(H, W) <= 128)

    fhr, fhi = _dft_matrix(H)
    fwr, fwi = _dft_matrix(W)

    if use_stacked:
        # Host-precompute the bf16, contraction-stacked real matrices.
        bw = jnp.concatenate(
            [jnp.concatenate([fwr, fwi], axis=1),
             jnp.concatenate([-fwi, fwr], axis=1)], axis=0)          # (2W, 2W)
        ch = jnp.concatenate(
            [jnp.concatenate([fhr, -fhi], axis=1),
             jnp.concatenate([fhi, fhr], axis=1)], axis=0)           # (2H, 2H)
        matrices = (_rhs3(bw), _lhs3(ch))       # (6W, 2W) bf16, (2H, 6H) bf16
        kernel = _ff_kernel_stacked
        per_mode_bytes = 88 * H * W             # blocks + in-kernel temporaries
    else:
        matrices = (_rhs3(fwr), _rhs3(fwi), _rhs3(fwr + fwi),       # (3W, W) bf16
                    _lhs3(fhr), _lhs3(fhi), _lhs3(fhr + fhi))       # (H, 3H) bf16
        kernel = _ff_kernel_karatsuba
        per_mode_bytes = 72 * H * W
    const_bytes = 2 * sum(int(m.size) for m in matrices)            # bf16 = 2 B

    # Per-chip VMEM sizing: v5e/v6e get ~100 MiB of their 128 MiB; v7x stays
    # well inside 64 MiB.
    vmem_limit = int(min(vmem_bytes - 12 * 1024 * 1024, 100 * 1024 * 1024))
    vmem_limit = max(vmem_limit, 32 * 1024 * 1024)
    out_bytes = 2 * 4 * H * W
    budget = vmem_limit - const_bytes - out_bytes - 6 * 1024 * 1024

    if mode_chunk is None:
        mode_chunk = _pick_mode_chunk(M, budget, per_mode_bytes)
    assert M % mode_chunk == 0, (M, mode_chunk)
    n_chunks = M // mode_chunk

    def _build(single_buffer_consts):
        if single_buffer_consts:
            def const_spec(shape):
                return pl.BlockSpec(shape, lambda k, c: (0, 0),
                                    pipeline_mode=pl.Buffered(1))
        else:
            def const_spec(shape):
                return pl.BlockSpec(shape, lambda k, c: (0, 0))

        in_specs = [
            pl.BlockSpec((1, mode_chunk, H, W), lambda k, c: (k, c, 0, 0)),  # re
            pl.BlockSpec((1, mode_chunk, H, W), lambda k, c: (k, c, 0, 0)),  # im
        ] + [const_spec(m.shape) for m in matrices]

        grid_spec = pltpu.PrefetchScalarGridSpec(
            num_scalar_prefetch=0,
            grid=(K, n_chunks),
            in_specs=in_specs,
            out_specs=pl.BlockSpec((1, H, W), lambda k, c: (k, 0, 0)),
        )
        return pl.pallas_call(
            kernel,
            out_shape=jax.ShapeDtypeStruct((K, H, W), jnp.float32),
            grid_spec=grid_spec,
            compiler_params=pltpu.CompilerParams(
                dimension_semantics=("parallel", "arbitrary"),
                vmem_limit_bytes=vmem_limit),
        )

    args = (exit_waves_re, exit_waves_im) + tuple(matrices)
    if hasattr(pl, "Buffered"):
        try:
            # Constant-index DFT matrices need only a single VMEM buffer.
            return _build(True)(*args)
        except Exception:
            pass  # older Pallas without BlockSpec(pipeline_mode=...)
    return _build(False)(*args)


def _reference(exit_waves_re, exit_waves_im):
    psi = exit_waves_re.astype(jnp.complex64) + 1j * exit_waves_im.astype(jnp.complex64)
    psi_ff = jnp.fft.fft2(psi, axes=(-2, -1))
    return jnp.sqrt(jnp.sum(jnp.abs(psi_ff) ** 2, axis=1))


if __name__ == "__main__":
    # Small, deterministic example: K=2 scan positions, M=4 probe modes, 16x16.
    key = jax.random.PRNGKey(0)
    k1, k2, k3 = jax.random.split(key, 3)
    K, M, H, W = 2, 4, 16, 16
    exit_re = jax.random.normal(k1, (K, M, H, W), dtype=jnp.float32)
    exit_im = jax.random.normal(k2, (K, M, H, W), dtype=jnp.float32)
    dpos = jax.random.normal(k3, (K, 2), dtype=jnp.float32)  # unused (non-subpixel branch)

    # mode_chunk=2 -> two chunks of two modes: exercises both the in-chunk
    # mode batching and the cross-chunk accumulate/finalize path.
    out = farfield_amplitude(exit_re, exit_im, dpos=dpos, epoch=(0,), mode_chunk=2)
    out = jax.block_until_ready(out)

    ref = jax.block_until_ready(_reference(exit_re, exit_im))
    assert out.shape == (K, H, W), out.shape
    err = float(jnp.max(jnp.abs(out - ref)))
    scale = float(jnp.max(jnp.abs(ref)))
    assert err <= 1e-3 * scale + 1e-3, f"max abs err {err} (scale {scale})"

    print("KERNEL_OK")
</pallas_src>

<mosaic_0001>
module attributes {stable_mosaic.version = 11 : i64} {
  func.func @_ff_kernel_stacked(%arg0: i32, %arg1: i32, %arg2: memref<1x2x16x16xf32, #tpu.memory_space<vmem>>, %arg3: memref<1x2x16x16xf32, #tpu.memory_space<vmem>>, %arg4: memref<96x32xbf16, #tpu.memory_space<vmem>>, %arg5: memref<32x96xbf16, #tpu.memory_space<vmem>>, %arg6: memref<1x16x16xf32, #tpu.memory_space<vmem>>) attributes {dimension_semantics = [#tpu.dimension_semantics<parallel>, #tpu.dimension_semantics<arbitrary>], iteration_bounds = array<i64: 2, 2>, scalar_prefetch = 0 : i64, scratch_operands = 0 : i64, tpu.core_type = #tpu.core_type<tc>, window_params = [{transform_indices = @transform_0, window_bounds = array<i64: 1, 2, 16, 16>}, {transform_indices = @transform_1, window_bounds = array<i64: 1, 2, 16, 16>}, {pipeline_mode = #tpu.pipeline_mode<synchronous>, transform_indices = @transform_2, window_bounds = array<i64: 96, 32>}, {pipeline_mode = #tpu.pipeline_mode<synchronous>, transform_indices = @transform_3, window_bounds = array<i64: 32, 96>}, {transform_indices = @transform_4, window_bounds = array<i64: 1, 16, 16>}]} {
    %c0_i32 = arith.constant 0 : i32
    %0 = arith.cmpi eq, %arg1, %c0_i32 : i32
    %1 = arith.extui %0 : i1 to i32
    %c0_i32_0 = arith.constant 0 : i32
    %2 = arith.cmpi ne, %1, %c0_i32_0 : i32
    scf.if %2 {
      %cst_20 = arith.constant 0.000000e+00 : f32
      %56 = vector.broadcast %cst_20 : f32 to vector<1x16x16xf32>
      %c0_21 = arith.constant 0 : index
      %c0_22 = arith.constant 0 : index
      %c0_23 = arith.constant 0 : index
      %57 = vector.load %arg6[%c0_21, %c0_22, %c0_23] : memref<1x16x16xf32, #tpu.memory_space<vmem>>, vector<1x16x16xf32>
      tpu.vector_store %arg6[%c0_21, %c0_22, %c0_23], %56 {strides = array<i32>} : memref<1x16x16xf32, #tpu.memory_space<vmem>>, vector<1x16x16xf32>,
    } else {
    }
    %c0 = arith.constant 0 : index
    %c0_1 = arith.constant 0 : index
    %c0_2 = arith.constant 0 : index
    %c0_3 = arith.constant 0 : index
    %3 = vector.load %arg2[%c0, %c0_1, %c0_2, %c0_3] : memref<1x2x16x16xf32, #tpu.memory_space<vmem>>, vector<1x2x16x16xf32>
    %4 = vector.shape_cast %3 : vector<1x2x16x16xf32> to vector<2x16x16xf32>
    %c0_4 = arith.constant 0 : index
    %c0_5 = arith.constant 0 : index
    %c0_6 = arith.constant 0 : index
    %c0_7 = arith.constant 0 : index
    %5 = vector.load %arg3[%c0_4, %c0_5, %c0_6, %c0_7] : memref<1x2x16x16xf32, #tpu.memory_space<vmem>>, vector<1x2x16x16xf32>
    %6 = vector.shape_cast %5 : vector<1x2x16x16xf32> to vector<2x16x16xf32>
    %7 = vector.shape_cast %4 : vector<2x16x16xf32> to vector<32x16xf32>
    %8 = vector.shape_cast %6 : vector<2x16x16xf32> to vector<32x16xf32>
    %9 = arith.truncf %7 : vector<32x16xf32> to vector<32x16xbf16>
    %10 = arith.extf %9 : vector<32x16xbf16> to vector<32x16xf32>
    %11 = arith.subf %7, %10 : vector<32x16xf32>
    %12 = arith.truncf %11 : vector<32x16xf32> to vector<32x16xbf16>
    %13 = arith.truncf %8 : vector<32x16xf32> to vector<32x16xbf16>
    %14 = arith.extf %13 : vector<32x16xbf16> to vector<32x16xf32>
    %15 = arith.subf %8, %14 : vector<32x16xf32>
    %16 = arith.truncf %15 : vector<32x16xf32> to vector<32x16xbf16>
    %17 = tpu.concatenate %9, %13, %9, %13, %12, %16 in 1 : vector<32x16xbf16>, vector<32x16xbf16>, vector<32x16xbf16>, vector<32x16xbf16>, vector<32x16xbf16>, vector<32x16xbf16> -> vector<32x96xbf16>
    %c0_8 = arith.constant 0 : index
    %c0_9 = arith.constant 0 : index
    %18 = vector.load %arg4[%c0_8, %c0_9] : memref<96x32xbf16, #tpu.memory_space<vmem>>, vector<96x32xbf16>
    %cst = arith.constant dense<0.000000e+00> : vector<32x32xf32>
    %19 = tpu.matmul %17, %18, %cst {dimension_numbers = #tpu.dot_dimension_numbers<[1], [0], [0], [1], [0, 0, 1, 1], [], []>} : vector<32x96xbf16>, vector<96x32xbf16>, vector<32x32xf32> -> vector<32x32xf32>
    %20 = vector.extract_strided_slice %19 {offsets = [0, 0], sizes = [16, 16], strides = [1, 1]} : vector<32x32xf32> to vector<16x16xf32>
    %21 = vector.extract_strided_slice %19 {offsets = [16, 0], sizes = [16, 16], strides = [1, 1]} : vector<32x32xf32> to vector<16x16xf32>
    %22 = tpu.concatenate %20, %21 in 1 : vector<16x16xf32>, vector<16x16xf32> -> vector<16x32xf32>
    %23 = vector.extract_strided_slice %19 {offsets = [0, 16], sizes = [16, 16], strides = [1, 1]} : vector<32x32xf32> to vector<16x16xf32>
    %24 = vector.extract_strided_slice %19 {offsets = [16, 16], sizes = [16, 16], strides = [1, 1]} : vector<32x32xf32> to vector<16x16xf32>
    %25 = tpu.concatenate %23, %24 in 1 : vector<16x16xf32>, vector<16x16xf32> -> vector<16x32xf32>
    %26 = arith.truncf %22 : vector<16x32xf32> to vector<16x32xbf16>
    %27 = arith.extf %26 : vector<16x32xbf16> to vector<16x32xf32>
    %28 = arith.subf %22, %27 : vector<16x32xf32>
    %29 = arith.truncf %28 : vector<16x32xf32> to vector<16x32xbf16>
    %30 = arith.truncf %25 : vector<16x32xf32> to vector<16x32xbf16>
    %31 = arith.extf %30 : vector<16x32xbf16> to vector<16x32xf32>
    %32 = arith.subf %25, %31 : vector<16x32xf32>
    %33 = arith.truncf %32 : vector<16x32xf32> to vector<16x32xbf16>
    %34 = tpu.concatenate %26, %30, %29, %33, %26, %30 in 0 : vector<16x32xbf16>, vector<16x32xbf16>, vector<16x32xbf16>, vector<16x32xbf16>, vector<16x32xbf16>, vector<16x32xbf16> -> vector<96x32xbf16>
    %c0_10 = arith.constant 0 : index
    %c0_11 = arith.constant 0 : index
    %35 = vector.load %arg5[%c0_10, %c0_11] : memref<32x96xbf16, #tpu.memory_space<vmem>>, vector<32x96xbf16>
    %cst_12 = arith.constant dense<0.000000e+00> : vector<32x32xf32>
    %36 = tpu.matmul %35, %34, %cst_12 {dimension_numbers = #tpu.dot_dimension_numbers<[1], [0], [0], [1], [0, 0, 1, 1], [], []>} : vector<32x96xbf16>, vector<96x32xbf16>, vector<32x32xf32> -> vector<32x32xf32>
    %37 = vector.extract_strided_slice %36 {offsets = [0, 0], sizes = [16, 32], strides = [1, 1]} : vector<32x32xf32> to vector<16x32xf32>
    %38 = vector.extract_strided_slice %36 {offsets = [0, 0], sizes = [16, 32], strides = [1, 1]} : vector<32x32xf32> to vector<16x32xf32>
    %39 = arith.mulf %37, %38 : vector<16x32xf32>
    %40 = vector.extract_strided_slice %36 {offsets = [16, 0], sizes = [16, 32], strides = [1, 1]} : vector<32x32xf32> to vector<16x32xf32>
    %41 = vector.extract_strided_slice %36 {offsets = [16, 0], sizes = [16, 32], strides = [1, 1]} : vector<32x32xf32> to vector<16x32xf32>
    %42 = arith.mulf %40, %41 : vector<16x32xf32>
    %43 = arith.addf %39, %42 : vector<16x32xf32>
    %44 = vector.extract_strided_slice %43 {offsets = [0, 0], sizes = [16, 16], strides = [1, 1]} : vector<16x32xf32> to vector<16x16xf32>
    %45 = vector.extract_strided_slice %43 {offsets = [0, 16], sizes = [16, 16], strides = [1, 1]} : vector<16x32xf32> to vector<16x16xf32>
    %46 = arith.addf %44, %45 : vector<16x16xf32>
    %c0_13 = arith.constant 0 : index
    %c0_14 = arith.constant 0 : index
    %c0_15 = arith.constant 0 : index
    %47 = vector.load %arg6[%c0_13, %c0_14, %c0_15] : memref<1x16x16xf32, #tpu.memory_space<vmem>>, vector<1x16x16xf32>
    %48 = vector.shape_cast %47 : vector<1x16x16xf32> to vector<16x16xf32>
    %49 = arith.addf %48, %46 : vector<16x16xf32>
    %c0_16 = arith.constant 0 : index
    %c0_17 = arith.constant 0 : index
    %c0_18 = arith.constant 0 : index
    %50 = vector.load %arg6[%c0_16, %c0_17, %c0_18] : memref<1x16x16xf32, #tpu.memory_space<vmem>>, vector<1x16x16xf32>
    %51 = vector.shape_cast %50 : vector<1x16x16xf32> to vector<16x16xf32>
    %52 = vector.shape_cast %49 : vector<16x16xf32> to vector<1x16x16xf32>
    tpu.vector_store %arg6[%c0_16, %c0_17, %c0_18], %52 {strides = array<i32>} : memref<1x16x16xf32, #tpu.memory_space<vmem>>, vector<1x16x16xf32>,
    %c1_i32 = arith.constant 1 : i32
    %53 = arith.cmpi eq, %arg1, %c1_i32 : i32
    %54 = arith.extui %53 : i1 to i32
    %c0_i32_19 = arith.constant 0 : i32
    %55 = arith.cmpi ne, %54, %c0_i32_19 : i32
    scf.if %55 {
      %c0_20 = arith.constant 0 : index
      %c0_21 = arith.constant 0 : index
      %c0_22 = arith.constant 0 : index
      %56 = vector.load %arg6[%c0_20, %c0_21, %c0_22] : memref<1x16x16xf32, #tpu.memory_space<vmem>>, vector<1x16x16xf32>
      %57 = vector.shape_cast %56 : vector<1x16x16xf32> to vector<16x16xf32>
      %58 = math.sqrt %57 : vector<16x16xf32>
      %c0_23 = arith.constant 0 : index
      %c0_24 = arith.constant 0 : index
      %c0_25 = arith.constant 0 : index
      %59 = vector.load %arg6[%c0_23, %c0_24, %c0_25] : memref<1x16x16xf32, #tpu.memory_space<vmem>>, vector<1x16x16xf32>
      %60 = vector.shape_cast %59 : vector<1x16x16xf32> to vector<16x16xf32>
      %61 = vector.shape_cast %58 : vector<16x16xf32> to vector<1x16x16xf32>
      tpu.vector_store %arg6[%c0_23, %c0_24, %c0_25], %61 {strides = array<i32>} : memref<1x16x16xf32, #tpu.memory_space<vmem>>, vector<1x16x16xf32>,
    } else {
    }
    return
  }
  func.func @transform_0(%arg0: i32, %arg1: i32) -> (i32, i32, i32, i32) {
    %c0_i32 = arith.constant 0 : i32
    %c0_i32_0 = arith.constant 0 : i32
    %c0_i32_1 = arith.constant 0 : i32
    return %arg0, %arg1, %c0_i32, %c0_i32_0 : i32, i32, i32, i32
  }
  func.func @transform_1(%arg0: i32, %arg1: i32) -> (i32, i32, i32, i32) {
    %c0_i32 = arith.constant 0 : i32
    %c0_i32_0 = arith.constant 0 : i32
    %c0_i32_1 = arith.constant 0 : i32
    return %arg0, %arg1, %c0_i32, %c0_i32_0 : i32, i32, i32, i32
  }
  func.func @transform_2(%arg0: i32, %arg1: i32) -> (i32, i32) {
    %c0_i32 = arith.constant 0 : i32
    %c0_i32_0 = arith.constant 0 : i32
    %c0_i32_1 = arith.constant 0 : i32
    return %c0_i32, %c0_i32_0 : i32, i32
  }
  func.func @transform_3(%arg0: i32, %arg1: i32) -> (i32, i32) {
    %c0_i32 = arith.constant 0 : i32
    %c0_i32_0 = arith.constant 0 : i32
    %c0_i32_1 = arith.constant 0 : i32
    return %c0_i32, %c0_i32_0 : i32, i32
  }
  func.func @transform_4(%arg0: i32, %arg1: i32) -> (i32, i32, i32) {
    %c0_i32 = arith.constant 0 : i32
    %c0_i32_0 = arith.constant 0 : i32
    %c0_i32_1 = arith.constant 0 : i32
    return %arg0, %c0_i32, %c0_i32_0 : i32, i32, i32
  }
}

module attributes {stable_mosaic.version = 11 : i64} {
  func.func @_ff_kernel_stacked(%arg0: i32, %arg1: i32, %arg2: memref<1x2x16x16xf32, #tpu.memory_space<vmem>>, %arg3: memref<1x2x16x16xf32, #tpu.memory_space<vmem>>, %arg4: memref<96x32xbf16, #tpu.memory_space<vmem>>, %arg5: memref<32x96xbf16, #tpu.memory_space<vmem>>, %arg6: memref<1x16x16xf32, #tpu.memory_space<vmem>>) attributes {dimension_semantics = [#tpu.dimension_semantics<parallel>, #tpu.dimension_semantics<arbitrary>], iteration_bounds = array<i64: 2, 2>, scalar_prefetch = 0 : i64, scratch_operands = 0 : i64, tpu.core_type = #tpu.core_type<tc>, window_params = [{transform_indices = @transform_0, window_bounds = array<i64: 1, 2, 16, 16>}, {transform_indices = @transform_1, window_bounds = array<i64: 1, 2, 16, 16>}, {pipeline_mode = #tpu.pipeline_mode<synchronous>, transform_indices = @transform_2, window_bounds = array<i64: 96, 32>}, {pipeline_mode = #tpu.pipeline_mode<synchronous>, transform_indices = @transform_3, window_bounds = array<i64: 32, 96>}, {transform_indices = @transform_4, window_bounds = array<i64: 1, 16, 16>}]} {
    %c0_i32 = arith.constant 0 : i32
    %0 = arith.cmpi eq, %arg1, %c0_i32 : i32
    %1 = arith.extui %0 : i1 to i32
    %c0_i32_0 = arith.constant 0 : i32
    %2 = arith.cmpi ne, %1, %c0_i32_0 : i32
    scf.if %2 {
      %cst_20 = arith.constant 0.000000e+00 : f32
      %56 = vector.broadcast %cst_20 : f32 to vector<1x16x16xf32>
      %c0_21 = arith.constant 0 : index
      %c0_22 = arith.constant 0 : index
      %c0_23 = arith.constant 0 : index
      %57 = vector.load %arg6[%c0_21, %c0_22, %c0_23] : memref<1x16x16xf32, #tpu.memory_space<vmem>>, vector<1x16x16xf32>
      tpu.vector_store %arg6[%c0_21, %c0_22, %c0_23], %56 {strides = array<i32>} : memref<1x16x16xf32, #tpu.memory_space<vmem>>, vector<1x16x16xf32>,
    } else {
    }
    %c0 = arith.constant 0 : index
    %c0_1 = arith.constant 0 : index
    %c0_2 = arith.constant 0 : index
    %c0_3 = arith.constant 0 : index
    %3 = vector.load %arg2[%c0, %c0_1, %c0_2, %c0_3] : memref<1x2x16x16xf32, #tpu.memory_space<vmem>>, vector<1x2x16x16xf32>
    %4 = vector.shape_cast %3 : vector<1x2x16x16xf32> to vector<2x16x16xf32>
    %c0_4 = arith.constant 0 : index
    %c0_5 = arith.constant 0 : index
    %c0_6 = arith.constant 0 : index
    %c0_7 = arith.constant 0 : index
    %5 = vector.load %arg3[%c0_4, %c0_5, %c0_6, %c0_7] : memref<1x2x16x16xf32, #tpu.memory_space<vmem>>, vector<1x2x16x16xf32>
    %6 = vector.shape_cast %5 : vector<1x2x16x16xf32> to vector<2x16x16xf32>
    %7 = vector.shape_cast %4 : vector<2x16x16xf32> to vector<32x16xf32>
    %8 = vector.shape_cast %6 : vector<2x16x16xf32> to vector<32x16xf32>
    %9 = arith.truncf %7 : vector<32x16xf32> to vector<32x16xbf16>
    %10 = arith.extf %9 : vector<32x16xbf16> to vector<32x16xf32>
    %11 = arith.subf %7, %10 : vector<32x16xf32>
    %12 = arith.truncf %11 : vector<32x16xf32> to vector<32x16xbf16>
    %13 = arith.truncf %8 : vector<32x16xf32> to vector<32x16xbf16>
    %14 = arith.extf %13 : vector<32x16xbf16> to vector<32x16xf32>
    %15 = arith.subf %8, %14 : vector<32x16xf32>
    %16 = arith.truncf %15 : vector<32x16xf32> to vector<32x16xbf16>
    %17 = tpu.concatenate %9, %13, %9, %13, %12, %16 in 1 : vector<32x16xbf16>, vector<32x16xbf16>, vector<32x16xbf16>, vector<32x16xbf16>, vector<32x16xbf16>, vector<32x16xbf16> -> vector<32x96xbf16>
    %c0_8 = arith.constant 0 : index
    %c0_9 = arith.constant 0 : index
    %18 = vector.load %arg4[%c0_8, %c0_9] : memref<96x32xbf16, #tpu.memory_space<vmem>>, vector<96x32xbf16>
    %cst = arith.constant dense<0.000000e+00> : vector<32x32xf32>
    %19 = tpu.matmul %17, %18, %cst {dimension_numbers = #tpu.dot_dimension_numbers<[1], [0], [0], [1], [0, 0, 1, 1], [], []>} : vector<32x96xbf16>, vector<96x32xbf16>, vector<32x32xf32> -> vector<32x32xf32>
    %20 = vector.extract_strided_slice %19 {offsets = [0, 0], sizes = [16, 16], strides = [1, 1]} : vector<32x32xf32> to vector<16x16xf32>
    %21 = vector.extract_strided_slice %19 {offsets = [16, 0], sizes = [16, 16], strides = [1, 1]} : vector<32x32xf32> to vector<16x16xf32>
    %22 = tpu.concatenate %20, %21 in 1 : vector<16x16xf32>, vector<16x16xf32> -> vector<16x32xf32>
    %23 = vector.extract_strided_slice %19 {offsets = [0, 16], sizes = [16, 16], strides = [1, 1]} : vector<32x32xf32> to vector<16x16xf32>
    %24 = vector.extract_strided_slice %19 {offsets = [16, 16], sizes = [16, 16], strides = [1, 1]} : vector<32x32xf32> to vector<16x16xf32>
    %25 = tpu.concatenate %23, %24 in 1 : vector<16x16xf32>, vector<16x16xf32> -> vector<16x32xf32>
    %26 = arith.truncf %22 : vector<16x32xf32> to vector<16x32xbf16>
    %27 = arith.extf %26 : vector<16x32xbf16> to vector<16x32xf32>
    %28 = arith.subf %22, %27 : vector<16x32xf32>
    %29 = arith.truncf %28 : vector<16x32xf32> to vector<16x32xbf16>
    %30 = arith.truncf %25 : vector<16x32xf32> to vector<16x32xbf16>
    %31 = arith.extf %30 : vector<16x32xbf16> to vector<16x32xf32>
    %32 = arith.subf %25, %31 : vector<16x32xf32>
    %33 = arith.truncf %32 : vector<16x32xf32> to vector<16x32xbf16>
    %34 = tpu.concatenate %26, %30, %29, %33, %26, %30 in 0 : vector<16x32xbf16>, vector<16x32xbf16>, vector<16x32xbf16>, vector<16x32xbf16>, vector<16x32xbf16>, vector<16x32xbf16> -> vector<96x32xbf16>
    %c0_10 = arith.constant 0 : index
    %c0_11 = arith.constant 0 : index
    %35 = vector.load %arg5[%c0_10, %c0_11] : memref<32x96xbf16, #tpu.memory_space<vmem>>, vector<32x96xbf16>
    %cst_12 = arith.constant dense<0.000000e+00> : vector<32x32xf32>
    %36 = tpu.matmul %35, %34, %cst_12 {dimension_numbers = #tpu.dot_dimension_numbers<[1], [0], [0], [1], [0, 0, 1, 1], [], []>} : vector<32x96xbf16>, vector<96x32xbf16>, vector<32x32xf32> -> vector<32x32xf32>
    %37 = vector.extract_strided_slice %36 {offsets = [0, 0], sizes = [16, 32], strides = [1, 1]} : vector<32x32xf32> to vector<16x32xf32>
    %38 = vector.extract_strided_slice %36 {offsets = [0, 0], sizes = [16, 32], strides = [1, 1]} : vector<32x32xf32> to vector<16x32xf32>
    %39 = arith.mulf %37, %38 : vector<16x32xf32>
    %40 = vector.extract_strided_slice %36 {offsets = [16, 0], sizes = [16, 32], strides = [1, 1]} : vector<32x32xf32> to vector<16x32xf32>
    %41 = vector.extract_strided_slice %36 {offsets = [16, 0], sizes = [16, 32], strides = [1, 1]} : vector<32x32xf32> to vector<16x32xf32>
    %42 = arith.mulf %40, %41 : vector<16x32xf32>
    %43 = arith.addf %39, %42 : vector<16x32xf32>
    %44 = vector.extract_strided_slice %43 {offsets = [0, 0], sizes = [16, 16], strides = [1, 1]} : vector<16x32xf32> to vector<16x16xf32>
    %45 = vector.extract_strided_slice %43 {offsets = [0, 16], sizes = [16, 16], strides = [1, 1]} : vector<16x32xf32> to vector<16x16xf32>
    %46 = arith.addf %44, %45 : vector<16x16xf32>
    %c0_13 = arith.constant 0 : index
    %c0_14 = arith.constant 0 : index
    %c0_15 = arith.constant 0 : index
    %47 = vector.load %arg6[%c0_13, %c0_14, %c0_15] : memref<1x16x16xf32, #tpu.memory_space<vmem>>, vector<1x16x16xf32>
    %48 = vector.shape_cast %47 : vector<1x16x16xf32> to vector<16x16xf32>
    %49 = arith.addf %48, %46 : vector<16x16xf32>
    %c0_16 = arith.constant 0 : index
    %c0_17 = arith.constant 0 : index
    %c0_18 = arith.constant 0 : index
    %50 = vector.load %arg6[%c0_16, %c0_17, %c0_18] : memref<1x16x16xf32, #tpu.memory_space<vmem>>, vector<1x16x16xf32>
    %51 = vector.shape_cast %50 : vector<1x16x16xf32> to vector<16x16xf32>
    %52 = vector.shape_cast %49 : vector<16x16xf32> to vector<1x16x16xf32>
    tpu.vector_store %arg6[%c0_16, %c0_17, %c0_18], %52 {strides = array<i32>} : memref<1x16x16xf32, #tpu.memory_space<vmem>>, vector<1x16x16xf32>,
    %c1_i32 = arith.constant 1 : i32
    %53 = arith.cmpi eq, %arg1, %c1_i32 : i32
    %54 = arith.extui %53 : i1 to i32
    %c0_i32_19 = arith.constant 0 : i32
    %55 = arith.cmpi ne, %54, %c0_i32_19 : i32
    scf.if %55 {
      %c0_20 = arith.constant 0 : index
      %c0_21 = arith.constant 0 : index
      %c0_22 = arith.constant 0 : index
      %56 = vector.load %arg6[%c0_20, %c0_21, %c0_22] : memref<1x16x16xf32, #tpu.memory_space<vmem>>, vector<1x16x16xf32>
      %57 = vector.shape_cast %56 : vector<1x16x16xf32> to vector<16x16xf32>
      %58 = math.sqrt %57 : vector<16x16xf32>
      %c0_23 = arith.constant 0 : index
      %c0_24 = arith.constant 0 : index
      %c0_25 = arith.constant 0 : index
      %59 = vector.load %arg6[%c0_23, %c0_24, %c0_25] : memref<1x16x16xf32, #tpu.memory_space<vmem>>, vector<1x16x16xf32>
      %60 = vector.shape_cast %59 : vector<1x16x16xf32> to vector<16x16xf32>
      %61 = vector.shape_cast %58 : vector<16x16xf32> to vector<1x16x16xf32>
      tpu.vector_store %arg6[%c0_23, %c0_24, %c0_25], %61 {strides = array<i32>} : memref<1x16x16xf32, #tpu.memory_space<vmem>>, vector<1x16x16xf32>,
    } else {
    }
    return
  }
  func.func @transform_0(%arg0: i32, %arg1: i32) -> (i32, i32, i32, i32) {
    %c0_i32 = arith.constant 0 : i32
    %c0_i32_0 = arith.constant 0 : i32
    %c0_i32_1 = arith.constant 0 : i32
    return %arg0, %arg1, %c0_i32, %c0_i32_0 : i32, i32, i32, i32
  }
  func.func @transform_1(%arg0: i32, %arg1: i32) -> (i32, i32, i32, i32) {
    %c0_i32 = arith.constant 0 : i32
    %c0_i32_0 = arith.constant 0 : i32
    %c0_i32_1 = arith.constant 0 : i32
    return %arg0, %arg1, %c0_i32, %c0_i32_0 : i32, i32, i32, i32
  }
  func.func @transform_2(%arg0: i32, %arg1: i32) -> (i32, i32) {
    %c0_i32 = arith.constant 0 : i32
    %c0_i32_0 = arith.constant 0 : i32
    %c0_i32_1 = arith.constant 0 : i32
    return %c0_i32, %c0_i32_0 : i32, i32
  }
  func.func @transform_3(%arg0: i32, %arg1: i32) -> (i32, i32) {
    %c0_i32 = arith.constant 0 : i32
    %c0_i32_0 = arith.constant 0 : i32
    %c0_i32_1 = arith.constant 0 : i32
    return %c0_i32, %c0_i32_0 : i32, i32
  }
  func.func @transform_4(%arg0: i32, %arg1: i32) -> (i32, i32, i32) {
    %c0_i32 = arith.constant 0 : i32
    %c0_i32_0 = arith.constant 0 : i32
    %c0_i32_1 = arith.constant 0 : i32
    return %arg0, %c0_i32, %c0_i32_0 : i32, i32, i32
  }
}

</mosaic_0001>

<llo_original>
// kernel: tpu_custom_call.1
$region0: #{tpu_custom_call.1}
  #allocation0 [shape = 'u32[]', space=smem, size = 0x4, offset = 0x4, fixed_abs, tag = 'smem constant byte address 0x4 - core index']
  #allocation1 [shape = 'u32[144,128]{1,0:T(1,128)}', space=vmem, size = 0x12000, scoped, tag = 'internal scratch']
  %s0 = inlined_call_operand.hbm [shape: f32[2,4,16,16], index: 0, kind: input, shape index: {}]
  %s1 = inlined_call_operand.hbm [shape: f32[2,4,16,16], index: 1, kind: input, shape index: {}]
  %s2 = inlined_call_operand.vmem [shape: bf16[96,32], index: 2, kind: input, shape index: {}]
  %s3 = inlined_call_operand.vmem [shape: bf16[32,96], index: 3, kind: input, shape index: {}]
  %s4 = inlined_call_operand.hbm [shape: f32[2,16,16], index: 4, kind: output, shape index: {}]
  %s5 = sld [smem:[#allocation0]]
  $region65: #{tpu_custom_call.1} parent=0
    _
  %s7 = ssub.s32 1, %s5
  %s8 = scalar_select 0, %s7, %s5
  $region1: #{tpu_custom_call.1} parent=0
    #allocation2 [shape = 'u8[32768]{0}', space=vmem, size = 0x8000, scoped, tag = 'input window, operand 0']
    #allocation3 [shape = 's32[2]{0}', space=sflag, size = 0x8, scoped, tag = 'scoped memory for tpu_custom_call.1']
    #allocation4 [shape = 's32[2]{0}', space=sflag, size = 0x8, scoped, tag = 'scoped memory for tpu_custom_call.1']
    #allocation5 [shape = 'u8[32768]{0}', space=vmem, size = 0x8000, scoped, tag = 'input window, operand 1']
    #allocation6 [shape = 's32[2]{0}', space=sflag, size = 0x8, scoped, tag = 'scoped memory for tpu_custom_call.1']
    #allocation7 [shape = 'u8[16384]{0}', space=vmem, size = 0x4000, scoped, tag = 'output window, operand 0']
    %9 = vsyncpa [#allocation3], 0
    %s10 = scalar_lea.sflag [#allocation3], 1
    %11 = vsyncpa %s10, 0
    %12 = vsyncpa [#allocation6], 0
    %s13 = scalar_lea.sflag [#allocation6], 1
    %14 = vsyncpa %s13, 0
    %15 = vsyncpa [#allocation4], 0
    %s16 = scalar_lea.sflag [#allocation4], 1
    %17 = vsyncpa %s16, 0
    loop: start=0, step=1, limit=6
    $region2: #{tpu_custom_call.1} parent=1 // loop_pre_header
      _
    $region3: #{tpu_custom_call.1} parent=1 // loop_header
      %s19 = sphi 0, %s23
      %p20 = scmp.ge.s32.totalorder %s19, 6
      %s26 = sphi 0, %s38
      %s27 = sphi 0, %s34
      %s28 = sphi 0, %s26
      %s29 = sphi 0, %s27
      %s30 = sphi 0, %s28
      %s31 = sphi 0, %s29
      %s43 = sphi 0, %s45
      %s46 = sphi 0, %s43
      %s47 = sphi 0, %s46
      %s63 = sphi 0, %s47
      %s71 = sphi 0, %s73
      %s74 = sphi 0, %s71
      %s75 = sphi 0, %s74
      %s91 = sphi 0, %s75
      %s95 = sphi 0, %s95
      %s97 = sphi 0, %s95
      %s98 = sphi 0, %s97
      %s112 = sphi 0, %s98
      %s116 = sphi 0, %s116
      %s118 = sphi 0, %s116
      %s119 = sphi 0, %s118
      %s133 = sphi 0, %s119
      %s139 = sphi 0, %s141
      %s142 = sphi 0, %s139
      %s143 = sphi 0, %s142
      %s159 = sphi 0, %s143
    $region4: #{tpu_custom_call.1} parent=1 // loop_header_branch
      %22 = sbr.rel (%p20) target = $region8
    $region5: #{tpu_custom_call.1} parent=1 // loop_body
      %s24 = ssub.s32 %s19, 1
      %s25 = ssub.s32 %s19, 2
      %s32 = sadd.s32 1, %s27
      %p33 = scmp.ge.s32.totalorder %s32, 2
      %s34 = scalar_select %p33, 0, %s32
      %s35 = sadd.s32 1, %s26
      %s36 = scalar_select %p33, %s35, %s26
      %p37 = scmp.ge.s32.totalorder %s36, 2
      %s38 = scalar_select %p37, 0, %s36
      %s39 = ssub.s32 %s26, %s38
      %s40 = ssub.s32 %s27, %s34
      %s41 = sor.u32 %s39, %s40
      %p42 = scmp.eq.s32.totalorder %s41, 0
      %s44 = sadd.s32 %s43, 1
      %s45 = scalar_select %p42, %s43, %s44
      %p48 = pneg %p42
      %p49 = scmp.eq.s32.totalorder %s19, 3
      %p50 = por %p48, %p49
      %p51 = scmp.ne.s32.totalorder %s43, %s46
      %p52 = scmp.eq.s32.totalorder %s19, 0
      %p53 = por %p51, %p52
      %p54 = scmp.ne.s32.totalorder %s43, %s46
      %p55 = scmp.eq.s32.totalorder %s24, 3
      %p56 = por %p54, %p55
      %p57 = scmp.ne.s32.totalorder %s46, %s47
      %p58 = scmp.eq.s32.totalorder %s24, 0
      %p59 = por %p57, %p58
      %p60 = scmp.ne.s32.totalorder %s46, %s47
      %p61 = scmp.eq.s32.totalorder %s25, 3
      %p62 = por %p60, %p61
      %p64 = scmp.ne.s32.totalorder %s47, %s63
      %p65 = scmp.eq.s32.totalorder %s25, 0
      %p66 = por %p64, %p65
      %s67 = ssub.s32 %s26, %s38
      %s68 = ssub.s32 %s27, %s34
      %s69 = sor.u32 %s67, %s68
      %p70 = scmp.eq.s32.totalorder %s69, 0
      %s72 = sadd.s32 %s71, 1
      %s73 = scalar_select %p70, %s71, %s72
      %p76 = pneg %p70
      %p77 = scmp.eq.s32.totalorder %s19, 3
      %p78 = por %p76, %p77
      %p79 = scmp.ne.s32.totalorder %s71, %s74
      %p80 = scmp.eq.s32.totalorder %s19, 0
      %p81 = por %p79, %p80
      %p82 = scmp.ne.s32.totalorder %s71, %s74
      %p83 = scmp.eq.s32.totalorder %s24, 3
      %p84 = por %p82, %p83
      %p85 = scmp.ne.s32.totalorder %s74, %s75
      %p86 = scmp.eq.s32.totalorder %s24, 0
      %p87 = por %p85, %p86
      %p88 = scmp.ne.s32.totalorder %s74, %s75
      %p89 = scmp.eq.s32.totalorder %s25, 3
      %p90 = por %p88, %p89
      %p92 = scmp.ne.s32.totalorder %s75, %s91
      %p93 = scmp.eq.s32.totalorder %s25, 0
      %p94 = por %p92, %p93
      %s96 = sadd.s32 %s95, 1
      %p99 = scmp.eq.s32.totalorder %s19, 3
      %p100 = scmp.ne.s32.totalorder %s95, %s97
      %p101 = scmp.eq.s32.totalorder %s19, 0
      %p102 = por %p100, %p101
      %p103 = scmp.ne.s32.totalorder %s95, %s97
      %p104 = scmp.eq.s32.totalorder %s24, 3
      %p105 = por %p103, %p104
      %p106 = scmp.ne.s32.totalorder %s97, %s98
      %p107 = scmp.eq.s32.totalorder %s24, 0
      %p108 = por %p106, %p107
      %p109 = scmp.ne.s32.totalorder %s97, %s98
      %p110 = scmp.eq.s32.totalorder %s25, 3
      %p111 = por %p109, %p110
      %p113 = scmp.ne.s32.totalorder %s98, %s112
      %p114 = scmp.eq.s32.totalorder %s25, 0
      %p115 = por %p113, %p114
      %s117 = sadd.s32 %s116, 1
      %p120 = scmp.eq.s32.totalorder %s19, 3
      %p121 = scmp.ne.s32.totalorder %s116, %s118
      %p122 = scmp.eq.s32.totalorder %s19, 0
      %p123 = por %p121, %p122
      %p124 = scmp.ne.s32.totalorder %s116, %s118
      %p125 = scmp.eq.s32.totalorder %s24, 3
      %p126 = por %p124, %p125
      %p127 = scmp.ne.s32.totalorder %s118, %s119
      %p128 = scmp.eq.s32.totalorder %s24, 0
      %p129 = por %p127, %p128
      %p130 = scmp.ne.s32.totalorder %s118, %s119
      %p131 = scmp.eq.s32.totalorder %s25, 3
      %p132 = por %p130, %p131
      %p134 = scmp.ne.s32.totalorder %s119, %s133
      %p135 = scmp.eq.s32.totalorder %s25, 0
      %p136 = por %p134, %p135
      %s137 = ssub.s32 %s26, %s38
      %p138 = scmp.eq.s32.totalorder %s137, 0
      %s140 = sadd.s32 %s139, 1
      %s141 = scalar_select %p138, %s139, %s140
      %p144 = pneg %p138
      %p145 = scmp.eq.s32.totalorder %s19, 3
      %p146 = por %p144, %p145
      %p147 = scmp.ne.s32.totalorder %s139, %s142
      %p148 = scmp.eq.s32.totalorder %s19, 0
      %p149 = por %p147, %p148
      %p150 = scmp.ne.s32.totalorder %s139, %s142
      %p151 = scmp.eq.s32.totalorder %s24, 3
      %p152 = por %p150, %p151
      %p153 = scmp.ne.s32.totalorder %s142, %s143
      %p154 = scmp.eq.s32.totalorder %s24, 0
      %p155 = por %p153, %p154
      %p156 = scmp.ne.s32.totalorder %s142, %s143
      %p157 = scmp.eq.s32.totalorder %s25, 3
      %p158 = por %p156, %p157
      %p160 = scmp.ne.s32.totalorder %s143, %s159
      %p161 = scmp.eq.s32.totalorder %s25, 0
      %p162 = por %p160, %p161
      %p163 = scmp.le.s32.totalorder 1, %s19
      %p164 = scmp.lt.s32.totalorder %s19, 5
      %p165 = pnand %p163, %p164
      %p166 = pneg %p165
      // Predicated region
      $region9: #{tpu_custom_call.1} parent=5 // pred_check
        _
      $region10: #{tpu_custom_call.1} parent=5 // pred_check_branch
        %168 = sbr.rel (%p165) target = $region12
      $region11: #{tpu_custom_call.1} parent=5 // pred_region
        %s169 = ssub.s32 %s19, 1
        // Predicated region
        $region13: #{tpu_custom_call.1} parent=11 // pred_check
          %p170 = pneg %p108
        $region14: #{tpu_custom_call.1} parent=11 // pred_check_branch
          %172 = sbr.rel (%p170) target = $region16
        $region15: #{tpu_custom_call.1} parent=11 // pred_region
          _
        $region16: #{tpu_custom_call.1} parent=11 // pred_fallthru
          _
        // Predicated region
        $region17: #{tpu_custom_call.1} parent=11 // pred_check
          %p173 = pneg %p129
        $region18: #{tpu_custom_call.1} parent=11 // pred_check_branch
          %175 = sbr.rel (%p173) target = $region20
        $region19: #{tpu_custom_call.1} parent=11 // pred_region
          _
        $region20: #{tpu_custom_call.1} parent=11 // pred_fallthru
          _
      $region12: #{tpu_custom_call.1} parent=5 // pred_fallthru
        _
      %p176 = scmp.lt.s32.totalorder %s19, 4
      // Predicated region
      $region21: #{tpu_custom_call.1} parent=5 // pred_check
        %p177 = pneg %p176
      $region22: #{tpu_custom_call.1} parent=5 // pred_check_branch
        %179 = sbr.rel (%p177) target = $region24
      $region23: #{tpu_custom_call.1} parent=5 // pred_region
        // Predicated region
        $region25: #{tpu_custom_call.1} parent=23 // pred_check
          %p180 = pneg %p53
        $region26: #{tpu_custom_call.1} parent=23 // pred_check_branch
          %182 = sbr.rel (%p180) target = $region28
        $region27: #{tpu_custom_call.1} parent=23 // pred_region
          %s183 = sand.u32 %s43, 1
          %s184 = scalar_lea.sflag [#allocation3], %s183
          %s185 = sand.u32 %s43, 1
          %s186 = smul.addr %s185, 32
          %s187 = scalar_lea.vmem [#allocation2], %s186
          %s188 = smul.u32 2, %s27
          %s190 = ssub.s32 512, 512
          %191 = vsyncadd %s184, %s190
          %s192 = smul.addr %s188, 2
          %s193 = smul.addr %s26, 8
          %s194 = sadd.s32 %s192, %s193
          %s195 = smul.addr %s194, 128
          %s196 = scalar_lea.hbm %s0, %s195
          %s197 = sshll.u32 %s187, 4
          %s198 = int_to_ptr.vmem [resolvable:$true] %s197
          %203 = dma.hbm_to_vmem [thread:$0]  %s196, 512, %s198, %s184, 128, 128, 8
        $region28: #{tpu_custom_call.1} parent=23 // pred_fallthru
          _
        // Predicated region
        $region29: #{tpu_custom_call.1} parent=23 // pred_check
          %p204 = pneg %p81
        $region30: #{tpu_custom_call.1} parent=23 // pred_check_branch
          %206 = sbr.rel (%p204) target = $region32
        $region31: #{tpu_custom_call.1} parent=23 // pred_region
          %s207 = sand.u32 %s71, 1
          %s208 = scalar_lea.sflag [#allocation6], %s207
          %s209 = sand.u32 %s71, 1
          %s210 = smul.addr %s209, 32
          %s211 = scalar_lea.vmem [#allocation5], %s210
          %s212 = smul.u32 2, %s27
          %s214 = ssub.s32 512, 512
          %215 = vsyncadd %s208, %s214
          %s216 = smul.addr %s212, 2
          %s217 = smul.addr %s26, 8
          %s218 = sadd.s32 %s216, %s217
          %s219 = smul.addr %s218, 128
          %s220 = scalar_lea.hbm %s1, %s219
          %s221 = sshll.u32 %s211, 4
          %s222 = int_to_ptr.vmem [resolvable:$true] %s221
          %227 = dma.hbm_to_vmem [thread:$0]  %s220, 512, %s222, %s208, 128, 128, 8
        $region32: #{tpu_custom_call.1} parent=23 // pred_fallthru
          _
      $region24: #{tpu_custom_call.1} parent=5 // pred_fallthru
        _
      %p228 = scmp.le.s32.totalorder 1, %s19
      %p229 = scmp.lt.s32.totalorder %s19, 5
      %p230 = pnand %p228, %p229
      %p231 = pneg %p230
      // Predicated region
      $region33: #{tpu_custom_call.1} parent=5 // pred_check
        _
      $region34: #{tpu_custom_call.1} parent=5 // pred_check_branch
        %233 = sbr.rel (%p230) target = $region36
      $region35: #{tpu_custom_call.1} parent=5 // pred_region
        %s234 = ssub.s32 %s19, 1
        %s235 = sand.u32 %s46, 1
        %s236 = scalar_lea.sflag [#allocation3], %s235
        %s237 = sand.u32 %s46, 1
        %s238 = smul.addr %s237, 32
        %s239 = scalar_lea.vmem [#allocation2], %s238
        // Predicated region
        $region37: #{tpu_custom_call.1} parent=35 // pred_check
          %p240 = pneg %p59
        $region38: #{tpu_custom_call.1} parent=35 // pred_check_branch
          %242 = sbr.rel (%p240) target = $region40
        $region39: #{tpu_custom_call.1} parent=35 // pred_region
          %243 = dma.done %s236, 512
        $region40: #{tpu_custom_call.1} parent=35 // pred_fallthru
          _
        %s244 = sand.u32 %s74, 1
        %s245 = scalar_lea.sflag [#allocation6], %s244
        %s246 = sand.u32 %s74, 1
        %s247 = smul.addr %s246, 32
        %s248 = scalar_lea.vmem [#allocation5], %s247
        // Predicated region
        $region41: #{tpu_custom_call.1} parent=35 // pred_check
          %p249 = pneg %p87
        $region42: #{tpu_custom_call.1} parent=35 // pred_check_branch
          %251 = sbr.rel (%p249) target = $region44
        $region43: #{tpu_custom_call.1} parent=35 // pred_region
          %252 = dma.done %s245, 512
        $region44: #{tpu_custom_call.1} parent=35 // pred_fallthru
          _
        %s253 = sand.u32 %s46, 1
        %s254 = scalar_lea.sflag [#allocation3], %s253
        %s255 = sand.u32 %s46, 1
        %s256 = smul.addr %s255, 32
        %s257 = scalar_lea.vmem [#allocation2], %s256
        %p258 = pneg %p59
        %p259 = pneg %p56
        %s260 = sand.u32 %s74, 1
        %s261 = scalar_lea.sflag [#allocation6], %s260
        %s262 = sand.u32 %s74, 1
        %s263 = smul.addr %s262, 32
        %s264 = scalar_lea.vmem [#allocation5], %s263
        %p265 = pneg %p87
        %p266 = pneg %p84
        %p267 = pneg %p108
        %p268 = pneg %p105
        %p269 = pneg %p129
        %p270 = pneg %p126
        %p271 = pneg %p155
        %p272 = pneg %p152
        %s273 = sand.u32 %s142, 1
        %s274 = scalar_lea.sflag [#allocation4], %s273
        %s275 = sand.u32 %s142, 1
        %s276 = smul.addr %s275, 16
        %s277 = scalar_lea.vmem [#allocation7], %s276
        %s278 = smul.u32 2, %s29
        %s279 = smul.u32 2, %s29
        %p281 = scmp.eq.s32.totalorder %s29, 0
        // Predicated region
        $region45: #{tpu_custom_call.1} parent=35 // pred_check
          %p282 = pneg %p281
        $region46: #{tpu_custom_call.1} parent=35 // pred_check_branch
          %284 = sbr.rel (%p282) target = $region48
        $region47: #{tpu_custom_call.1} parent=35 // pred_region
          %vm285 = vcmask 130048
          %286 = vst.msk [vmem:[%s277] sm:$0xff] %vm285, 0.0
          %287 = vst.msk [vmem:[%s277 + $0x8] sm:$0xff] %vm285, 0.0
        $region48: #{tpu_custom_call.1} parent=35 // pred_fallthru
          _
        %v288 = vld [vmem:[%s239] sm:$0xff]
        %v289 = vld [vmem:[%s239 + $0x8] sm:$0xff]
        %v290 = vld [vmem:[%s239 + $0x10] sm:$0xff]
        %v291 = vld [vmem:[%s239 + $0x18] sm:$0xff]
        %v292 = vld [vmem:[%s248] sm:$0xff]
        %v293 = vld [vmem:[%s248 + $0x8] sm:$0xff]
        %v294 = vld [vmem:[%s248 + $0x10] sm:$0xff]
        %v295 = vld [vmem:[%s248 + $0x18] sm:$0xff]
        %v296 = vpack.c.bf16 %v289, %v288
        %v297 = vpack.c.bf16 %v291, %v290
        %v298 = vunpack.c.l.bf16 %v296
        %v299 = vunpack.c.h.bf16 %v296
        %v300 = vunpack.c.l.bf16 %v297
        %v301 = vunpack.c.h.bf16 %v297
        %v302 = vsub.f32 %v288, %v298
        %v303 = vsub.f32 %v289, %v299
        %v304 = vsub.f32 %v290, %v300
        %v305 = vsub.f32 %v291, %v301
        %v306 = vpack.c.bf16 %v303, %v302
        %v307 = vpack.c.bf16 %v305, %v304
        %v308 = vpack.c.bf16 %v293, %v292
        %v309 = vpack.c.bf16 %v295, %v294
        %v310 = vunpack.c.l.bf16 %v308
        %v311 = vunpack.c.h.bf16 %v308
        %v312 = vunpack.c.l.bf16 %v309
        %v313 = vunpack.c.h.bf16 %v309
        %v314 = vsub.f32 %v292, %v310
        %v315 = vsub.f32 %v293, %v311
        %v316 = vsub.f32 %v294, %v312
        %v317 = vsub.f32 %v295, %v313
        %v318 = vpack.c.bf16 %v315, %v314
        %v319 = vpack.c.bf16 %v317, %v316
        %322 = vrot.lane.b32.xlu0 %v308, 16
        %v323 = vpop.permute.xlu0 %322
        %324 = vrot.lane.b32.xlu0 %v309, 16
        %v325 = vpop.permute.xlu0 %324
        %328 = vrot.lane.b32.xlu0 %v296, 32
        %v329 = vpop.permute.xlu0 %328
        %330 = vrot.lane.b32.xlu0 %v297, 32
        %v331 = vpop.permute.xlu0 %330
        %332 = vrot.lane.b32.xlu0 %v308, 48
        %v333 = vpop.permute.xlu0 %332
        %334 = vrot.lane.b32.xlu0 %v309, 48
        %v335 = vpop.permute.xlu0 %334
        %338 = vrot.lane.b32.xlu0 %v306, 64
        %v339 = vpop.permute.xlu0 %338
        %340 = vrot.lane.b32.xlu0 %v307, 64
        %v341 = vpop.permute.xlu0 %340
        %344 = vrot.lane.b32.xlu0 %v318, 80
        %v345 = vpop.permute.xlu0 %344
        %346 = vrot.lane.b32.xlu0 %v319, 80
        %v347 = vpop.permute.xlu0 %346
        %vm348 = vcmask 130048
        %v351 = vsel %vm348, %v296, %v323
        %v354 = vsel %vm348, %v297, %v325
        %vm355 = vcmask 261120
        %v357 = vsel %vm355, %v351, %v329
        %v359 = vsel %vm355, %v354, %v331
        %vm360 = vcmask 392192
        %v362 = vsel %vm360, %v357, %v333
        %v364 = vsel %vm360, %v359, %v335
        %vm365 = vcmask 523264
        %v367 = vsel %vm365, %v362, %v339
        %v369 = vsel %vm365, %v364, %v341
        %vm370 = vcmask 654336
        %v372 = vsel %vm370, %v367, %v345
        %v374 = vsel %vm370, %v369, %v347
        %v375 = vld [vmem:[%s2] sm:$0xf]
        %v376 = vld [vmem:[%s2 + $0x4] sm:$0xf]
        %v377 = vld [vmem:[%s2 + $0x8] sm:$0xf]
        %v378 = vld [vmem:[%s2 + $0xc] sm:$0xf]
        %v379 = vld [vmem:[%s2 + $0x10] sm:$0xf]
        %v380 = vld [vmem:[%s2 + $0x14] sm:$0xf]
        %v381 = vld [vmem:[%s2 + $0x18] sm:$0xf]
        %v382 = vld [vmem:[%s2 + $0x1c] sm:$0xf]
        %v383 = vld [vmem:[%s2 + $0x20] sm:$0xf]
        %v384 = vld [vmem:[%s2 + $0x24] sm:$0xf]
        %v385 = vld [vmem:[%s2 + $0x28] sm:$0xf]
        %v386 = vld [vmem:[%s2 + $0x2c] sm:$0xf]
        %v399 = vunpack.c.l.b16 %v375
        %v400 = vunpack.c.l.b16 %v376
        %v401 = vunpack.c.l.b16 %v377
        %v402 = vunpack.c.l.b16 %v378
        %v403 = vunpack.c.l.b16 %v379
        %v404 = vunpack.c.l.b16 %v380
        %v405 = vunpack.c.l.b16 %v381
        %v406 = vunpack.c.l.b16 %v382
        %v407 = vunpack.c.l.b16 %v383
        %v408 = vunpack.c.l.b16 %v384
        %v409 = vunpack.c.l.b16 %v385
        %v410 = vunpack.c.l.b16 %v386
        %v411 = vpack.c.b16 %v400, %v399
        %v412 = vpack.c.b16 %v402, %v401
        %v413 = vpack.c.b16 %v404, %v403
        %v414 = vpack.c.b16 %v406, %v405
        %v415 = vpack.c.b16 %v408, %v407
        %v416 = vpack.c.b16 %v410, %v409
        %vm423 = vcmask 785408
        %v424 = vsel %vm423, %v372, 0
        %v426 = vsel %vm423, %v374, 0
        %428 = vmatprep.subr.bf16.mxu0 0
        %429 = vmatpush1.bf16.msra.mxu0 %v411
        %430 = vmatprep.subr.bf16.mxu0 0
        %431 = vmatpush1.bf16.msra.mxu0 %v412
        %432 = vmatprep.subr.bf16.mxu0 0
        %433 = vmatpush1.bf16.msra.mxu0 %v413
        %434 = vmatprep.subr.bf16.mxu0 0
        %435 = vmatpush1.bf16.msra.mxu0 %v414
        %436 = vmatprep.subr.bf16.mxu0 0
        %437 = vmatpush1.bf16.msra.mxu0 %v415
        %438 = vmatprep.subr.bf16.mxu0 0
        %439 = vmatpush1.bf16.msra.mxu0 %v416
        %440 = vmatprep.subr.bf16.mxu0 0
        %441 = vmatpush1.bf16.msra.mxu0 0
        %442 = vmatprep.subr.bf16.mxu0 0
        %443 = vmatpush1.bf16.msra.mxu0 0
        %444 = vmatprep.subr.bf16.mxu0 0
        %445 = vmatpush1.bf16.msra.mxu0 0
        %446 = vmatprep.subr.bf16.mxu0 0
        %447 = vmatpush1.bf16.msra.mxu0 0
        %448 = vmatprep.subr.bf16.mxu0 0
        %449 = vmatpush1.bf16.msra.mxu0 0
        %450 = vmatprep.subr.bf16.mxu0 0
        %451 = vmatpush1.bf16.msra.mxu0 0
        %452 = vmatprep.subr.bf16.mxu0 0
        %453 = vmatpush1.bf16.msra.mxu0 0
        %454 = vmatprep.subr.bf16.mxu0 0
        %455 = vmatpush1.bf16.msra.mxu0 0
        %456 = vmatprep.subr.bf16.mxu0 0
        %457 = vmatpush1.bf16.msra.mxu0 0
        %458 = vmatprep.subr.bf16.mxu0 0
        %459 = vmatpush1.bf16.msra.mxu0 0
        %460 = vmatprep.mubr.bf16.mxu0 0
        %461 = vmatmul.mubr.bf16.gmra.mrb[0].mxu0 %v424
        %v462 = vpop.f32.mrb[0].mxu0
        %v463 = vadd.f32 0.0, %v462
        %v464 = vpop.f32.mrb[0].mxu0
        %v465 = vpop.f32.mrb[0].mxu0
        %v466 = vadd.f32 0.0, %v465
        %v467 = vpop.f32.mrb[0].mxu0
        %468 = vmatprep.mubr.bf16.mxu0 0
        %469 = vmatmul.mubr.bf16.gmra.mrb[0].mxu0 %v426
        %v470 = vpop.f32.mrb[0].mxu0
        %v471 = vadd.f32 0.0, %v470
        %v472 = vpop.f32.mrb[0].mxu0
        %v473 = vpop.f32.mrb[0].mxu0
        %v474 = vadd.f32 0.0, %v473
        %v475 = vpop.f32.mrb[0].mxu0
        %476 = vdwg.mxu0
        %479 = vrot.lane.b32.xlu0 %v471, 16
        %v480 = vpop.permute.xlu0 %479
        %481 = vrot.lane.b32.xlu0 %v474, 16
        %v482 = vpop.permute.xlu0 %481
        %v485 = vsel %vm348, %v463, %v480
        %v486 = vsel %vm348, %v466, %v482
        %489 = vrot.lane.b32.xlu0 %v463, 112
        %v490 = vpop.permute.xlu0 %489
        %491 = vrot.lane.b32.xlu0 %v466, 112
        %v492 = vpop.permute.xlu0 %491
        %v495 = vsel %vm348, %v490, %v471
        %v496 = vsel %vm348, %v492, %v474
        %v497 = vpack.c.bf16 %v486, %v485
        %v498 = vunpack.c.l.bf16 %v497
        %v499 = vunpack.c.h.bf16 %v497
        %v500 = vsub.f32 %v485, %v498
        %v501 = vsub.f32 %v486, %v499
        %v502 = vpack.c.bf16 %v501, %v500
        %v503 = vpack.c.bf16 %v496, %v495
        %v504 = vunpack.c.l.bf16 %v503
        %v505 = vunpack.c.h.bf16 %v503
        %v506 = vsub.f32 %v495, %v504
        %v507 = vsub.f32 %v496, %v505
        %v508 = vpack.c.bf16 %v507, %v506
        %v509 = vld [vmem:[%s3] sm:$0xf]
        %v510 = vld [vmem:[%s3 + $0x4] sm:$0xf]
        %v511 = vld [vmem:[%s3 + $0x8] sm:$0xf]
        %v512 = vld [vmem:[%s3 + $0xc] sm:$0xf]
        %v517 = vunpack.c.l.b16 %v509
        %v518 = vunpack.c.l.b16 %v510
        %v519 = vunpack.c.l.b16 %v511
        %v520 = vunpack.c.l.b16 %v512
        %v521 = vpack.c.b16 %v518, %v517
        %v522 = vpack.c.b16 %v520, %v519
        %v524 = vsel %vm423, %v521, 0
        %v527 = vsel %vm423, %v522, 0
        %529 = vmatprep.subr.bf16.mxu0 0
        %530 = vmatpush1.bf16.msra.mxu0 %v497
        %531 = vmatprep.subr.bf16.mxu0 0
        %532 = vmatpush1.bf16.msra.mxu0 %v503
        %533 = vmatprep.subr.bf16.mxu0 0
        %534 = vmatpush1.bf16.msra.mxu0 %v502
        %535 = vmatprep.subr.bf16.mxu0 0
        %536 = vmatpush1.bf16.msra.mxu0 %v508
        %537 = vmatprep.subr.bf16.mxu0 0
        %538 = vmatpush1.bf16.msra.mxu0 %v497
        %539 = vmatprep.subr.bf16.mxu0 0
        %540 = vmatpush1.bf16.msra.mxu0 %v503
        %541 = vmatprep.subr.bf16.mxu0 0
        %542 = vmatpush1.bf16.msra.mxu0 0
        %543 = vmatprep.subr.bf16.mxu0 0
        %544 = vmatpush1.bf16.msra.mxu0 0
        %545 = vmatprep.subr.bf16.mxu0 0
        %546 = vmatpush1.bf16.msra.mxu0 0
        %547 = vmatprep.subr.bf16.mxu0 0
        %548 = vmatpush1.bf16.msra.mxu0 0
        %549 = vmatprep.subr.bf16.mxu0 0
        %550 = vmatpush1.bf16.msra.mxu0 0
        %551 = vmatprep.subr.bf16.mxu0 0
        %552 = vmatpush1.bf16.msra.mxu0 0
        %553 = vmatprep.subr.bf16.mxu0 0
        %554 = vmatpush1.bf16.msra.mxu0 0
        %555 = vmatprep.subr.bf16.mxu0 0
        %556 = vmatpush1.bf16.msra.mxu0 0
        %557 = vmatprep.subr.bf16.mxu0 0
        %558 = vmatpush1.bf16.msra.mxu0 0
        %559 = vmatprep.subr.bf16.mxu0 0
        %560 = vmatpush1.bf16.msra.mxu0 0
        %561 = vmatprep.mubr.bf16.mxu0 0
        %562 = vmatmul.mubr.bf16.gmra.mrb[0].mxu0 %v524
        %v563 = vpop.f32.mrb[0].mxu0
        %v564 = vadd.f32 0.0, %v563
        %v565 = vpop.f32.mrb[0].mxu0
        %v566 = vpop.f32.mrb[0].mxu0
        %v567 = vadd.f32 0.0, %v566
        %v568 = vpop.f32.mrb[0].mxu0
        %569 = vmatprep.mubr.bf16.mxu0 0
        %570 = vmatmul.mubr.bf16.gmra.mrb[0].mxu0 %v527
        %v571 = vpop.f32.mrb[0].mxu0
        %v572 = vadd.f32 0.0, %v571
        %v573 = vpop.f32.mrb[0].mxu0
        %v574 = vpop.f32.mrb[0].mxu0
        %v575 = vadd.f32 0.0, %v574
        %v576 = vpop.f32.mrb[0].mxu0
        %577 = vdwg.mxu0
        %v578 = vmul.f32 %v564, %v564
        %v579 = vmul.f32 %v567, %v567
        %v580 = vmul.f32 %v572, %v572
        %v581 = vmul.f32 %v575, %v575
        %v582 = vadd.f32 %v578, %v580
        %v583 = vadd.f32 %v579, %v581
        %586 = vrot.lane.b32.xlu0 %v582, 112
        %v587 = vpop.permute.xlu0 %586
        %588 = vrot.lane.b32.xlu0 %v583, 112
        %v589 = vpop.permute.xlu0 %588
        %v592 = vadd.f32 %v582, %v587
        %v593 = vadd.f32 %v583, %v589
        %v594 = vld [vmem:[%s277] sm:$0xff]
        %v595 = vld [vmem:[%s277 + $0x8] sm:$0xff]
        %v596 = vadd.f32 %v594, %v592
        %v597 = vadd.f32 %v595, %v593
        %598 = vst.msk [vmem:[%s277] sm:$0xff] %vm348, %v596
        %599 = vst.msk [vmem:[%s277 + $0x8] sm:$0xff] %vm348, %v597
        %p600 = scmp.eq.s32.totalorder %s29, 1
        // Predicated region
        $region49: #{tpu_custom_call.1} parent=35 // pred_check
          %p601 = pneg %p600
        $region50: #{tpu_custom_call.1} parent=35 // pred_check_branch
          %603 = sbr.rel (%p601) target = $region52
        $region51: #{tpu_custom_call.1} parent=35 // pred_region
          %v604 = vld [vmem:[%s277] sm:$0xff]
          %v605 = vld [vmem:[%s277 + $0x8] sm:$0xff]
          %v606 = vrsqrt.pop %v604
          %v607 = vmul.f32 %v604, %v606
          %vm608 = vcmp.eq.f32.partialorder %v604, inf
          %v609 = vsel %vm608, %v604, %v607
          %vm610 = vcmp.eq.f32.partialorder %v604, 0.0
          %v611 = vand.u32 %v604, 2147483648
          %v612 = vsel %vm610, %v611, %v609
          %v613 = vrsqrt.pop %v605
          %v614 = vmul.f32 %v605, %v613
          %vm615 = vcmp.eq.f32.partialorder %v605, inf
          %v616 = vsel %vm615, %v605, %v614
          %vm617 = vcmp.eq.f32.partialorder %v605, 0.0
          %v618 = vand.u32 %v605, 2147483648
          %v619 = vsel %vm617, %v618, %v616
          %620 = vst.msk [vmem:[%s277] sm:$0xff] %vm348, %v612
          %621 = vst.msk [vmem:[%s277 + $0x8] sm:$0xff] %vm348, %v619
        $region52: #{tpu_custom_call.1} parent=35 // pred_fallthru
          _
        %s622 = sand.u32 %s142, 1
        %s623 = scalar_lea.sflag [#allocation4], %s622
        %s624 = sand.u32 %s142, 1
        %s625 = smul.addr %s624, 16
        %s626 = scalar_lea.vmem [#allocation7], %s625
        // Predicated region
        $region53: #{tpu_custom_call.1} parent=35 // pred_check
          %p627 = pneg %p152
        $region54: #{tpu_custom_call.1} parent=35 // pred_check_branch
          %629 = sbr.rel (%p627) target = $region56
        $region55: #{tpu_custom_call.1} parent=35 // pred_region
          %s631 = ssub.s32 256, 256
          %632 = vsyncadd %s623, %s631
          %s633 = smul.addr %s28, 2
          %s634 = smul.addr %s633, 128
          %s635 = scalar_lea.hbm %s4, %s634
          %s636 = sshll.u32 %s626, 4
          %s637 = int_to_ptr.vmem [resolvable:$true] %s636
          %642 = dma.vmem_to_hbm [thread:$0]  %s637, 256, %s635, %s623, 128, 128, 8
        $region56: #{tpu_custom_call.1} parent=35 // pred_fallthru
          _
      $region36: #{tpu_custom_call.1} parent=5 // pred_fallthru
        _
      %p643 = scmp.le.s32.totalorder 2, %s19
      // Predicated region
      $region57: #{tpu_custom_call.1} parent=5 // pred_check
        %p644 = pneg %p643
      $region58: #{tpu_custom_call.1} parent=5 // pred_check_branch
        %646 = sbr.rel (%p644) target = $region60
      $region59: #{tpu_custom_call.1} parent=5 // pred_region
        %s647 = ssub.s32 %s19, 2
        // Predicated region
        $region61: #{tpu_custom_call.1} parent=59 // pred_check
          %p648 = pneg %p158
        $region62: #{tpu_custom_call.1} parent=59 // pred_check_branch
          %650 = sbr.rel (%p648) target = $region64
        $region63: #{tpu_custom_call.1} parent=59 // pred_region
          %s651 = sand.u32 %s143, 1
          %s652 = scalar_lea.sflag [#allocation4], %s651
          %s653 = sand.u32 %s143, 1
          %s654 = smul.addr %s653, 16
          %s655 = scalar_lea.vmem [#allocation7], %s654
          %656 = dma.done %s652, 256
        $region64: #{tpu_custom_call.1} parent=59 // pred_fallthru
          _
      $region60: #{tpu_custom_call.1} parent=5 // pred_fallthru
        _
    $region6: #{tpu_custom_call.1} parent=1 // loop_footer
      %s23 = sadd.s32 1, %s19
    $region7: #{tpu_custom_call.1} parent=1 // loop_footer_branch
      %18 = sbr.rel target = $region3
    $region8: #{tpu_custom_call.1} parent=1 // loop_exit
      _
    %657 = vsyncpa [#allocation3], 1
    %s658 = scalar_lea.sflag [#allocation3], 1
    %659 = vsyncpa %s658, 1
    %660 = vsyncpa [#allocation6], 1
    %s661 = scalar_lea.sflag [#allocation6], 1
    %662 = vsyncpa %s661, 1
    %663 = vsyncpa [#allocation4], 1
    %s664 = scalar_lea.sflag [#allocation4], 1
    %665 = vsyncpa %s664, 1

// kernel: tpu_custom_call.1
$region0: #{tpu_custom_call.1}
  #allocation0 [shape = 'u32[]', space=smem, size = 0x4, offset = 0x4, fixed_abs, tag = 'smem constant byte address 0x4 - core index']
  #allocation1 [shape = 'u32[144,128]{1,0:T(1,128)}', space=vmem, size = 0x12000, scoped, tag = 'internal scratch']
  %s0 = inlined_call_operand.hbm [shape: f32[2,4,16,16], index: 0, kind: input, shape index: {}]
  %s1 = inlined_call_operand.hbm [shape: f32[2,4,16,16], index: 1, kind: input, shape index: {}]
  %s2 = inlined_call_operand.vmem [shape: bf16[96,32], index: 2, kind: input, shape index: {}]
  %s3 = inlined_call_operand.vmem [shape: bf16[32,96], index: 3, kind: input, shape index: {}]
  %s4 = inlined_call_operand.hbm [shape: f32[2,16,16], index: 4, kind: output, shape index: {}]
  %s5 = sld [smem:[#allocation0]]
  $region65: #{tpu_custom_call.1} parent=0
    _
  %s7 = ssub.s32 1, %s5
  %s8 = scalar_select 0, %s7, %s5
  $region1: #{tpu_custom_call.1} parent=0
    #allocation2 [shape = 'u8[32768]{0}', space=vmem, size = 0x8000, scoped, tag = 'input window, operand 0']
    #allocation3 [shape = 's32[2]{0}', space=sflag, size = 0x8, scoped, tag = 'scoped memory for tpu_custom_call.1']
    #allocation4 [shape = 's32[2]{0}', space=sflag, size = 0x8, scoped, tag = 'scoped memory for tpu_custom_call.1']
    #allocation5 [shape = 'u8[32768]{0}', space=vmem, size = 0x8000, scoped, tag = 'input window, operand 1']
    #allocation6 [shape = 's32[2]{0}', space=sflag, size = 0x8, scoped, tag = 'scoped memory for tpu_custom_call.1']
    #allocation7 [shape = 'u8[16384]{0}', space=vmem, size = 0x4000, scoped, tag = 'output window, operand 0']
    %9 = vsyncpa [#allocation3], 0
    %s10 = scalar_lea.sflag [#allocation3], 1
    %11 = vsyncpa %s10, 0
    %12 = vsyncpa [#allocation6], 0
    %s13 = scalar_lea.sflag [#allocation6], 1
    %14 = vsyncpa %s13, 0
    %15 = vsyncpa [#allocation4], 0
    %s16 = scalar_lea.sflag [#allocation4], 1
    %17 = vsyncpa %s16, 0
    loop: start=0, step=1, limit=6
    $region2: #{tpu_custom_call.1} parent=1 // loop_pre_header
      _
    $region3: #{tpu_custom_call.1} parent=1 // loop_header
      %s19 = sphi 0, %s23
      %p20 = scmp.ge.s32.totalorder %s19, 6
      %s26 = sphi 0, %s38
      %s27 = sphi 0, %s34
      %s28 = sphi 0, %s26
      %s29 = sphi 0, %s27
      %s30 = sphi 0, %s28
      %s31 = sphi 0, %s29
      %s43 = sphi 0, %s45
      %s46 = sphi 0, %s43
      %s47 = sphi 0, %s46
      %s63 = sphi 0, %s47
      %s71 = sphi 0, %s73
      %s74 = sphi 0, %s71
      %s75 = sphi 0, %s74
      %s91 = sphi 0, %s75
      %s95 = sphi 0, %s95
      %s97 = sphi 0, %s95
      %s98 = sphi 0, %s97
      %s112 = sphi 0, %s98
      %s116 = sphi 0, %s116
      %s118 = sphi 0, %s116
      %s119 = sphi 0, %s118
      %s133 = sphi 0, %s119
      %s139 = sphi 0, %s141
      %s142 = sphi 0, %s139
      %s143 = sphi 0, %s142
      %s159 = sphi 0, %s143
    $region4: #{tpu_custom_call.1} parent=1 // loop_header_branch
      %22 = sbr.rel (%p20) target = $region8
    $region5: #{tpu_custom_call.1} parent=1 // loop_body
      %s24 = ssub.s32 %s19, 1
      %s25 = ssub.s32 %s19, 2
      %s32 = sadd.s32 1, %s27
      %p33 = scmp.ge.s32.totalorder %s32, 2
      %s34 = scalar_select %p33, 0, %s32
      %s35 = sadd.s32 1, %s26
      %s36 = scalar_select %p33, %s35, %s26
      %p37 = scmp.ge.s32.totalorder %s36, 2
      %s38 = scalar_select %p37, 0, %s36
      %s39 = ssub.s32 %s26, %s38
      %s40 = ssub.s32 %s27, %s34
      %s41 = sor.u32 %s39, %s40
      %p42 = scmp.eq.s32.totalorder %s41, 0
      %s44 = sadd.s32 %s43, 1
      %s45 = scalar_select %p42, %s43, %s44
      %p48 = pneg %p42
      %p49 = scmp.eq.s32.totalorder %s19, 3
      %p50 = por %p48, %p49
      %p51 = scmp.ne.s32.totalorder %s43, %s46
      %p52 = scmp.eq.s32.totalorder %s19, 0
      %p53 = por %p51, %p52
      %p54 = scmp.ne.s32.totalorder %s43, %s46
      %p55 = scmp.eq.s32.totalorder %s24, 3
      %p56 = por %p54, %p55
      %p57 = scmp.ne.s32.totalorder %s46, %s47
      %p58 = scmp.eq.s32.totalorder %s24, 0
      %p59 = por %p57, %p58
      %p60 = scmp.ne.s32.totalorder %s46, %s47
      %p61 = scmp.eq.s32.totalorder %s25, 3
      %p62 = por %p60, %p61
      %p64 = scmp.ne.s32.totalorder %s47, %s63
      %p65 = scmp.eq.s32.totalorder %s25, 0
      %p66 = por %p64, %p65
      %s67 = ssub.s32 %s26, %s38
      %s68 = ssub.s32 %s27, %s34
      %s69 = sor.u32 %s67, %s68
      %p70 = scmp.eq.s32.totalorder %s69, 0
      %s72 = sadd.s32 %s71, 1
      %s73 = scalar_select %p70, %s71, %s72
      %p76 = pneg %p70
      %p77 = scmp.eq.s32.totalorder %s19, 3
      %p78 = por %p76, %p77
      %p79 = scmp.ne.s32.totalorder %s71, %s74
      %p80 = scmp.eq.s32.totalorder %s19, 0
      %p81 = por %p79, %p80
      %p82 = scmp.ne.s32.totalorder %s71, %s74
      %p83 = scmp.eq.s32.totalorder %s24, 3
      %p84 = por %p82, %p83
      %p85 = scmp.ne.s32.totalorder %s74, %s75
      %p86 = scmp.eq.s32.totalorder %s24, 0
      %p87 = por %p85, %p86
      %p88 = scmp.ne.s32.totalorder %s74, %s75
      %p89 = scmp.eq.s32.totalorder %s25, 3
      %p90 = por %p88, %p89
      %p92 = scmp.ne.s32.totalorder %s75, %s91
      %p93 = scmp.eq.s32.totalorder %s25, 0
      %p94 = por %p92, %p93
      %s96 = sadd.s32 %s95, 1
      %p99 = scmp.eq.s32.totalorder %s19, 3
      %p100 = scmp.ne.s32.totalorder %s95, %s97
      %p101 = scmp.eq.s32.totalorder %s19, 0
      %p102 = por %p100, %p101
      %p103 = scmp.ne.s32.totalorder %s95, %s97
      %p104 = scmp.eq.s32.totalorder %s24, 3
      %p105 = por %p103, %p104
      %p106 = scmp.ne.s32.totalorder %s97, %s98
      %p107 = scmp.eq.s32.totalorder %s24, 0
      %p108 = por %p106, %p107
      %p109 = scmp.ne.s32.totalorder %s97, %s98
      %p110 = scmp.eq.s32.totalorder %s25, 3
      %p111 = por %p109, %p110
      %p113 = scmp.ne.s32.totalorder %s98, %s112
      %p114 = scmp.eq.s32.totalorder %s25, 0
      %p115 = por %p113, %p114
      %s117 = sadd.s32 %s116, 1
      %p120 = scmp.eq.s32.totalorder %s19, 3
      %p121 = scmp.ne.s32.totalorder %s116, %s118
      %p122 = scmp.eq.s32.totalorder %s19, 0
      %p123 = por %p121, %p122
      %p124 = scmp.ne.s32.totalorder %s116, %s118
      %p125 = scmp.eq.s32.totalorder %s24, 3
      %p126 = por %p124, %p125
      %p127 = scmp.ne.s32.totalorder %s118, %s119
      %p128 = scmp.eq.s32.totalorder %s24, 0
      %p129 = por %p127, %p128
      %p130 = scmp.ne.s32.totalorder %s118, %s119
      %p131 = scmp.eq.s32.totalorder %s25, 3
      %p132 = por %p130, %p131
      %p134 = scmp.ne.s32.totalorder %s119, %s133
      %p135 = scmp.eq.s32.totalorder %s25, 0
      %p136 = por %p134, %p135
      %s137 = ssub.s32 %s26, %s38
      %p138 = scmp.eq.s32.totalorder %s137, 0
      %s140 = sadd.s32 %s139, 1
      %s141 = scalar_select %p138, %s139, %s140
      %p144 = pneg %p138
      %p145 = scmp.eq.s32.totalorder %s19, 3
      %p146 = por %p144, %p145
      %p147 = scmp.ne.s32.totalorder %s139, %s142
      %p148 = scmp.eq.s32.totalorder %s19, 0
      %p149 = por %p147, %p148
      %p150 = scmp.ne.s32.totalorder %s139, %s142
      %p151 = scmp.eq.s32.totalorder %s24, 3
      %p152 = por %p150, %p151
      %p153 = scmp.ne.s32.totalorder %s142, %s143
      %p154 = scmp.eq.s32.totalorder %s24, 0
      %p155 = por %p153, %p154
      %p156 = scmp.ne.s32.totalorder %s142, %s143
      %p157 = scmp.eq.s32.totalorder %s25, 3
      %p158 = por %p156, %p157
      %p160 = scmp.ne.s32.totalorder %s143, %s159
      %p161 = scmp.eq.s32.totalorder %s25, 0
      %p162 = por %p160, %p161
      %p163 = scmp.le.s32.totalorder 1, %s19
      %p164 = scmp.lt.s32.totalorder %s19, 5
      %p165 = pnand %p163, %p164
      %p166 = pneg %p165
      // Predicated region
      $region9: #{tpu_custom_call.1} parent=5 // pred_check
        _
      $region10: #{tpu_custom_call.1} parent=5 // pred_check_branch
        %168 = sbr.rel (%p165) target = $region12
      $region11: #{tpu_custom_call.1} parent=5 // pred_region
        %s169 = ssub.s32 %s19, 1
        // Predicated region
        $region13: #{tpu_custom_call.1} parent=11 // pred_check
          %p170 = pneg %p108
        $region14: #{tpu_custom_call.1} parent=11 // pred_check_branch
          %172 = sbr.rel (%p170) target = $region16
        $region15: #{tpu_custom_call.1} parent=11 // pred_region
          _
        $region16: #{tpu_custom_call.1} parent=11 // pred_fallthru
          _
        // Predicated region
        $region17: #{tpu_custom_call.1} parent=11 // pred_check
          %p173 = pneg %p129
        $region18: #{tpu_custom_call.1} parent=11 // pred_check_branch
          %175 = sbr.rel (%p173) target = $region20
        $region19: #{tpu_custom_call.1} parent=11 // pred_region
          _
        $region20: #{tpu_custom_call.1} parent=11 // pred_fallthru
          _
      $region12: #{tpu_custom_call.1} parent=5 // pred_fallthru
        _
      %p176 = scmp.lt.s32.totalorder %s19, 4
      // Predicated region
      $region21: #{tpu_custom_call.1} parent=5 // pred_check
        %p177 = pneg %p176
      $region22: #{tpu_custom_call.1} parent=5 // pred_check_branch
        %179 = sbr.rel (%p177) target = $region24
      $region23: #{tpu_custom_call.1} parent=5 // pred_region
        // Predicated region
        $region25: #{tpu_custom_call.1} parent=23 // pred_check
          %p180 = pneg %p53
        $region26: #{tpu_custom_call.1} parent=23 // pred_check_branch
          %182 = sbr.rel (%p180) target = $region28
        $region27: #{tpu_custom_call.1} parent=23 // pred_region
          %s183 = sand.u32 %s43, 1
          %s184 = scalar_lea.sflag [#allocation3], %s183
          %s185 = sand.u32 %s43, 1
          %s186 = smul.addr %s185, 32
          %s187 = scalar_lea.vmem [#allocation2], %s186
          %s188 = smul.u32 2, %s27
          %s190 = ssub.s32 512, 512
          %191 = vsyncadd %s184, %s190
          %s192 = smul.addr %s188, 2
          %s193 = smul.addr %s26, 8
          %s194 = sadd.s32 %s192, %s193
          %s195 = smul.addr %s194, 128
          %s196 = scalar_lea.hbm %s0, %s195
          %s197 = sshll.u32 %s187, 4
          %s198 = int_to_ptr.vmem [resolvable:$true] %s197
          %203 = dma.hbm_to_vmem [thread:$0]  %s196, 512, %s198, %s184, 128, 128, 8
        $region28: #{tpu_custom_call.1} parent=23 // pred_fallthru
          _
        // Predicated region
        $region29: #{tpu_custom_call.1} parent=23 // pred_check
          %p204 = pneg %p81
        $region30: #{tpu_custom_call.1} parent=23 // pred_check_branch
          %206 = sbr.rel (%p204) target = $region32
        $region31: #{tpu_custom_call.1} parent=23 // pred_region
          %s207 = sand.u32 %s71, 1
          %s208 = scalar_lea.sflag [#allocation6], %s207
          %s209 = sand.u32 %s71, 1
          %s210 = smul.addr %s209, 32
          %s211 = scalar_lea.vmem [#allocation5], %s210
          %s212 = smul.u32 2, %s27
          %s214 = ssub.s32 512, 512
          %215 = vsyncadd %s208, %s214
          %s216 = smul.addr %s212, 2
          %s217 = smul.addr %s26, 8
          %s218 = sadd.s32 %s216, %s217
          %s219 = smul.addr %s218, 128
          %s220 = scalar_lea.hbm %s1, %s219
          %s221 = sshll.u32 %s211, 4
          %s222 = int_to_ptr.vmem [resolvable:$true] %s221
          %227 = dma.hbm_to_vmem [thread:$0]  %s220, 512, %s222, %s208, 128, 128, 8
        $region32: #{tpu_custom_call.1} parent=23 // pred_fallthru
          _
      $region24: #{tpu_custom_call.1} parent=5 // pred_fallthru
        _
      %p228 = scmp.le.s32.totalorder 1, %s19
      %p229 = scmp.lt.s32.totalorder %s19, 5
      %p230 = pnand %p228, %p229
      %p231 = pneg %p230
      // Predicated region
      $region33: #{tpu_custom_call.1} parent=5 // pred_check
        _
      $region34: #{tpu_custom_call.1} parent=5 // pred_check_branch
        %233 = sbr.rel (%p230) target = $region36
      $region35: #{tpu_custom_call.1} parent=5 // pred_region
        %s234 = ssub.s32 %s19, 1
        %s235 = sand.u32 %s46, 1
        %s236 = scalar_lea.sflag [#allocation3], %s235
        %s237 = sand.u32 %s46, 1
        %s238 = smul.addr %s237, 32
        %s239 = scalar_lea.vmem [#allocation2], %s238
        // Predicated region
        $region37: #{tpu_custom_call.1} parent=35 // pred_check
          %p240 = pneg %p59
        $region38: #{tpu_custom_call.1} parent=35 // pred_check_branch
          %242 = sbr.rel (%p240) target = $region40
        $region39: #{tpu_custom_call.1} parent=35 // pred_region
          %243 = dma.done %s236, 512
        $region40: #{tpu_custom_call.1} parent=35 // pred_fallthru
          _
        %s244 = sand.u32 %s74, 1
        %s245 = scalar_lea.sflag [#allocation6], %s244
        %s246 = sand.u32 %s74, 1
        %s247 = smul.addr %s246, 32
        %s248 = scalar_lea.vmem [#allocation5], %s247
        // Predicated region
        $region41: #{tpu_custom_call.1} parent=35 // pred_check
          %p249 = pneg %p87
        $region42: #{tpu_custom_call.1} parent=35 // pred_check_branch
          %251 = sbr.rel (%p249) target = $region44
        $region43: #{tpu_custom_call.1} parent=35 // pred_region
          %252 = dma.done %s245, 512
        $region44: #{tpu_custom_call.1} parent=35 // pred_fallthru
          _
        %s253 = sand.u32 %s46, 1
        %s254 = scalar_lea.sflag [#allocation3], %s253
        %s255 = sand.u32 %s46, 1
        %s256 = smul.addr %s255, 32
        %s257 = scalar_lea.vmem [#allocation2], %s256
        %p258 = pneg %p59
        %p259 = pneg %p56
        %s260 = sand.u32 %s74, 1
        %s261 = scalar_lea.sflag [#allocation6], %s260
        %s262 = sand.u32 %s74, 1
        %s263 = smul.addr %s262, 32
        %s264 = scalar_lea.vmem [#allocation5], %s263
        %p265 = pneg %p87
        %p266 = pneg %p84
        %p267 = pneg %p108
        %p268 = pneg %p105
        %p269 = pneg %p129
        %p270 = pneg %p126
        %p271 = pneg %p155
        %p272 = pneg %p152
        %s273 = sand.u32 %s142, 1
        %s274 = scalar_lea.sflag [#allocation4], %s273
        %s275 = sand.u32 %s142, 1
        %s276 = smul.addr %s275, 16
        %s277 = scalar_lea.vmem [#allocation7], %s276
        %s278 = smul.u32 2, %s29
        %s279 = smul.u32 2, %s29
        %p281 = scmp.eq.s32.totalorder %s29, 0
        // Predicated region
        $region45: #{tpu_custom_call.1} parent=35 // pred_check
          %p282 = pneg %p281
        $region46: #{tpu_custom_call.1} parent=35 // pred_check_branch
          %284 = sbr.rel (%p282) target = $region48
        $region47: #{tpu_custom_call.1} parent=35 // pred_region
          %vm285 = vcmask 130048
          %286 = vst.msk [vmem:[%s277] sm:$0xff] %vm285, 0.0
          %287 = vst.msk [vmem:[%s277 + $0x8] sm:$0xff] %vm285, 0.0
        $region48: #{tpu_custom_call.1} parent=35 // pred_fallthru
          _
        %v288 = vld [vmem:[%s239] sm:$0xff]
        %v289 = vld [vmem:[%s239 + $0x8] sm:$0xff]
        %v290 = vld [vmem:[%s239 + $0x10] sm:$0xff]
        %v291 = vld [vmem:[%s239 + $0x18] sm:$0xff]
        %v292 = vld [vmem:[%s248] sm:$0xff]
        %v293 = vld [vmem:[%s248 + $0x8] sm:$0xff]
        %v294 = vld [vmem:[%s248 + $0x10] sm:$0xff]
        %v295 = vld [vmem:[%s248 + $0x18] sm:$0xff]
        %v296 = vpack.c.bf16 %v289, %v288
        %v297 = vpack.c.bf16 %v291, %v290
        %v298 = vunpack.c.l.bf16 %v296
        %v299 = vunpack.c.h.bf16 %v296
        %v300 = vunpack.c.l.bf16 %v297
        %v301 = vunpack.c.h.bf16 %v297
        %v302 = vsub.f32 %v288, %v298
        %v303 = vsub.f32 %v289, %v299
        %v304 = vsub.f32 %v290, %v300
        %v305 = vsub.f32 %v291, %v301
        %v306 = vpack.c.bf16 %v303, %v302
        %v307 = vpack.c.bf16 %v305, %v304
        %v308 = vpack.c.bf16 %v293, %v292
        %v309 = vpack.c.bf16 %v295, %v294
        %v310 = vunpack.c.l.bf16 %v308
        %v311 = vunpack.c.h.bf16 %v308
        %v312 = vunpack.c.l.bf16 %v309
        %v313 = vunpack.c.h.bf16 %v309
        %v314 = vsub.f32 %v292, %v310
        %v315 = vsub.f32 %v293, %v311
        %v316 = vsub.f32 %v294, %v312
        %v317 = vsub.f32 %v295, %v313
        %v318 = vpack.c.bf16 %v315, %v314
        %v319 = vpack.c.bf16 %v317, %v316
        %322 = vrot.lane.b32.xlu0 %v308, 16
        %v323 = vpop.permute.xlu0 %322
        %324 = vrot.lane.b32.xlu0 %v309, 16
        %v325 = vpop.permute.xlu0 %324
        %328 = vrot.lane.b32.xlu0 %v296, 32
        %v329 = vpop.permute.xlu0 %328
        %330 = vrot.lane.b32.xlu0 %v297, 32
        %v331 = vpop.permute.xlu0 %330
        %332 = vrot.lane.b32.xlu0 %v308, 48
        %v333 = vpop.permute.xlu0 %332
        %334 = vrot.lane.b32.xlu0 %v309, 48
        %v335 = vpop.permute.xlu0 %334
        %338 = vrot.lane.b32.xlu0 %v306, 64
        %v339 = vpop.permute.xlu0 %338
        %340 = vrot.lane.b32.xlu0 %v307, 64
        %v341 = vpop.permute.xlu0 %340
        %344 = vrot.lane.b32.xlu0 %v318, 80
        %v345 = vpop.permute.xlu0 %344
        %346 = vrot.lane.b32.xlu0 %v319, 80
        %v347 = vpop.permute.xlu0 %346
        %vm348 = vcmask 130048
        %v351 = vsel %vm348, %v296, %v323
        %v354 = vsel %vm348, %v297, %v325
        %vm355 = vcmask 261120
        %v357 = vsel %vm355, %v351, %v329
        %v359 = vsel %vm355, %v354, %v331
        %vm360 = vcmask 392192
        %v362 = vsel %vm360, %v357, %v333
        %v364 = vsel %vm360, %v359, %v335
        %vm365 = vcmask 523264
        %v367 = vsel %vm365, %v362, %v339
        %v369 = vsel %vm365, %v364, %v341
        %vm370 = vcmask 654336
        %v372 = vsel %vm370, %v367, %v345
        %v374 = vsel %vm370, %v369, %v347
        %v375 = vld [vmem:[%s2] sm:$0xf]
        %v376 = vld [vmem:[%s2 + $0x4] sm:$0xf]
        %v377 = vld [vmem:[%s2 + $0x8] sm:$0xf]
        %v378 = vld [vmem:[%s2 + $0xc] sm:$0xf]
        %v379 = vld [vmem:[%s2 + $0x10] sm:$0xf]
        %v380 = vld [vmem:[%s2 + $0x14] sm:$0xf]
        %v381 = vld [vmem:[%s2 + $0x18] sm:$0xf]
        %v382 = vld [vmem:[%s2 + $0x1c] sm:$0xf]
        %v383 = vld [vmem:[%s2 + $0x20] sm:$0xf]
        %v384 = vld [vmem:[%s2 + $0x24] sm:$0xf]
        %v385 = vld [vmem:[%s2 + $0x28] sm:$0xf]
        %v386 = vld [vmem:[%s2 + $0x2c] sm:$0xf]
        %v399 = vunpack.c.l.b16 %v375
        %v400 = vunpack.c.l.b16 %v376
        %v401 = vunpack.c.l.b16 %v377
        %v402 = vunpack.c.l.b16 %v378
        %v403 = vunpack.c.l.b16 %v379
        %v404 = vunpack.c.l.b16 %v380
        %v405 = vunpack.c.l.b16 %v381
        %v406 = vunpack.c.l.b16 %v382
        %v407 = vunpack.c.l.b16 %v383
        %v408 = vunpack.c.l.b16 %v384
        %v409 = vunpack.c.l.b16 %v385
        %v410 = vunpack.c.l.b16 %v386
        %v411 = vpack.c.b16 %v400, %v399
        %v412 = vpack.c.b16 %v402, %v401
        %v413 = vpack.c.b16 %v404, %v403
        %v414 = vpack.c.b16 %v406, %v405
        %v415 = vpack.c.b16 %v408, %v407
        %v416 = vpack.c.b16 %v410, %v409
        %vm423 = vcmask 785408
        %v424 = vsel %vm423, %v372, 0
        %v426 = vsel %vm423, %v374, 0
        %428 = vmatprep.subr.bf16.mxu0 0
        %429 = vmatpush1.bf16.msra.mxu0 %v411
        %430 = vmatprep.subr.bf16.mxu0 0
        %431 = vmatpush1.bf16.msra.mxu0 %v412
        %432 = vmatprep.subr.bf16.mxu0 0
        %433 = vmatpush1.bf16.msra.mxu0 %v413
        %434 = vmatprep.subr.bf16.mxu0 0
        %435 = vmatpush1.bf16.msra.mxu0 %v414
        %436 = vmatprep.subr.bf16.mxu0 0
        %437 = vmatpush1.bf16.msra.mxu0 %v415
        %438 = vmatprep.subr.bf16.mxu0 0
        %439 = vmatpush1.bf16.msra.mxu0 %v416
        %440 = vmatprep.subr.bf16.mxu0 0
        %441 = vmatpush1.bf16.msra.mxu0 0
        %442 = vmatprep.subr.bf16.mxu0 0
        %443 = vmatpush1.bf16.msra.mxu0 0
        %444 = vmatprep.subr.bf16.mxu0 0
        %445 = vmatpush1.bf16.msra.mxu0 0
        %446 = vmatprep.subr.bf16.mxu0 0
        %447 = vmatpush1.bf16.msra.mxu0 0
        %448 = vmatprep.subr.bf16.mxu0 0
        %449 = vmatpush1.bf16.msra.mxu0 0
        %450 = vmatprep.subr.bf16.mxu0 0
        %451 = vmatpush1.bf16.msra.mxu0 0
        %452 = vmatprep.subr.bf16.mxu0 0
        %453 = vmatpush1.bf16.msra.mxu0 0
        %454 = vmatprep.subr.bf16.mxu0 0
        %455 = vmatpush1.bf16.msra.mxu0 0
        %456 = vmatprep.subr.bf16.mxu0 0
        %457 = vmatpush1.bf16.msra.mxu0 0
        %458 = vmatprep.subr.bf16.mxu0 0
        %459 = vmatpush1.bf16.msra.mxu0 0
        %460 = vmatprep.mubr.bf16.mxu0 0
        %461 = vmatmul.mubr.bf16.gmra.mrb[0].mxu0 %v424
        %v462 = vpop.f32.mrb[0].mxu0
        %v463 = vadd.f32 0.0, %v462
        %v464 = vpop.f32.mrb[0].mxu0
        %v465 = vpop.f32.mrb[0].mxu0
        %v466 = vadd.f32 0.0, %v465
        %v467 = vpop.f32.mrb[0].mxu0
        %468 = vmatprep.mubr.bf16.mxu0 0
        %469 = vmatmul.mubr.bf16.gmra.mrb[0].mxu0 %v426
        %v470 = vpop.f32.mrb[0].mxu0
        %v471 = vadd.f32 0.0, %v470
        %v472 = vpop.f32.mrb[0].mxu0
        %v473 = vpop.f32.mrb[0].mxu0
        %v474 = vadd.f32 0.0, %v473
        %v475 = vpop.f32.mrb[0].mxu0
        %476 = vdwg.mxu0
        %479 = vrot.lane.b32.xlu0 %v471, 16
        %v480 = vpop.permute.xlu0 %479
        %481 = vrot.lane.b32.xlu0 %v474, 16
        %v482 = vpop.permute.xlu0 %481
        %v485 = vsel %vm348, %v463, %v480
        %v486 = vsel %vm348, %v466, %v482
        %489 = vrot.lane.b32.xlu0 %v463, 112
        %v490 = vpop.permute.xlu0 %489
        %491 = vrot.lane.b32.xlu0 %v466, 112
        %v492 = vpop.permute.xlu0 %491
        %v495 = vsel %vm348, %v490, %v471
        %v496 = vsel %vm348, %v492, %v474
        %v497 = vpack.c.bf16 %v486, %v485
        %v498 = vunpack.c.l.bf16 %v497
        %v499 = vunpack.c.h.bf16 %v497
        %v500 = vsub.f32 %v485, %v498
        %v501 = vsub.f32 %v486, %v499
        %v502 = vpack.c.bf16 %v501, %v500
        %v503 = vpack.c.bf16 %v496, %v495
        %v504 = vunpack.c.l.bf16 %v503
        %v505 = vunpack.c.h.bf16 %v503
        %v506 = vsub.f32 %v495, %v504
        %v507 = vsub.f32 %v496, %v505
        %v508 = vpack.c.bf16 %v507, %v506
        %v509 = vld [vmem:[%s3] sm:$0xf]
        %v510 = vld [vmem:[%s3 + $0x4] sm:$0xf]
        %v511 = vld [vmem:[%s3 + $0x8] sm:$0xf]
        %v512 = vld [vmem:[%s3 + $0xc] sm:$0xf]
        %v517 = vunpack.c.l.b16 %v509
        %v518 = vunpack.c.l.b16 %v510
        %v519 = vunpack.c.l.b16 %v511
        %v520 = vunpack.c.l.b16 %v512
        %v521 = vpack.c.b16 %v518, %v517
        %v522 = vpack.c.b16 %v520, %v519
        %v524 = vsel %vm423, %v521, 0
        %v527 = vsel %vm423, %v522, 0
        %529 = vmatprep.subr.bf16.mxu0 0
        %530 = vmatpush1.bf16.msra.mxu0 %v497
        %531 = vmatprep.subr.bf16.mxu0 0
        %532 = vmatpush1.bf16.msra.mxu0 %v503
        %533 = vmatprep.subr.bf16.mxu0 0
        %534 = vmatpush1.bf16.msra.mxu0 %v502
        %535 = vmatprep.subr.bf16.mxu0 0
        %536 = vmatpush1.bf16.msra.mxu0 %v508
        %537 = vmatprep.subr.bf16.mxu0 0
        %538 = vmatpush1.bf16.msra.mxu0 %v497
        %539 = vmatprep.subr.bf16.mxu0 0
        %540 = vmatpush1.bf16.msra.mxu0 %v503
        %541 = vmatprep.subr.bf16.mxu0 0
        %542 = vmatpush1.bf16.msra.mxu0 0
        %543 = vmatprep.subr.bf16.mxu0 0
        %544 = vmatpush1.bf16.msra.mxu0 0
        %545 = vmatprep.subr.bf16.mxu0 0
        %546 = vmatpush1.bf16.msra.mxu0 0
        %547 = vmatprep.subr.bf16.mxu0 0
        %548 = vmatpush1.bf16.msra.mxu0 0
        %549 = vmatprep.subr.bf16.mxu0 0
        %550 = vmatpush1.bf16.msra.mxu0 0
        %551 = vmatprep.subr.bf16.mxu0 0
        %552 = vmatpush1.bf16.msra.mxu0 0
        %553 = vmatprep.subr.bf16.mxu0 0
        %554 = vmatpush1.bf16.msra.mxu0 0
        %555 = vmatprep.subr.bf16.mxu0 0
        %556 = vmatpush1.bf16.msra.mxu0 0
        %557 = vmatprep.subr.bf16.mxu0 0
        %558 = vmatpush1.bf16.msra.mxu0 0
        %559 = vmatprep.subr.bf16.mxu0 0
        %560 = vmatpush1.bf16.msra.mxu0 0
        %561 = vmatprep.mubr.bf16.mxu0 0
        %562 = vmatmul.mubr.bf16.gmra.mrb[0].mxu0 %v524
        %v563 = vpop.f32.mrb[0].mxu0
        %v564 = vadd.f32 0.0, %v563
        %v565 = vpop.f32.mrb[0].mxu0
        %v566 = vpop.f32.mrb[0].mxu0
        %v567 = vadd.f32 0.0, %v566
        %v568 = vpop.f32.mrb[0].mxu0
        %569 = vmatprep.mubr.bf16.mxu0 0
        %570 = vmatmul.mubr.bf16.gmra.mrb[0].mxu0 %v527
        %v571 = vpop.f32.mrb[0].mxu0
        %v572 = vadd.f32 0.0, %v571
        %v573 = vpop.f32.mrb[0].mxu0
        %v574 = vpop.f32.mrb[0].mxu0
        %v575 = vadd.f32 0.0, %v574
        %v576 = vpop.f32.mrb[0].mxu0
        %577 = vdwg.mxu0
        %v578 = vmul.f32 %v564, %v564
        %v579 = vmul.f32 %v567, %v567
        %v580 = vmul.f32 %v572, %v572
        %v581 = vmul.f32 %v575, %v575
        %v582 = vadd.f32 %v578, %v580
        %v583 = vadd.f32 %v579, %v581
        %586 = vrot.lane.b32.xlu0 %v582, 112
        %v587 = vpop.permute.xlu0 %586
        %588 = vrot.lane.b32.xlu0 %v583, 112
        %v589 = vpop.permute.xlu0 %588
        %v592 = vadd.f32 %v582, %v587
        %v593 = vadd.f32 %v583, %v589
        %v594 = vld [vmem:[%s277] sm:$0xff]
        %v595 = vld [vmem:[%s277 + $0x8] sm:$0xff]
        %v596 = vadd.f32 %v594, %v592
        %v597 = vadd.f32 %v595, %v593
        %598 = vst.msk [vmem:[%s277] sm:$0xff] %vm348, %v596
        %599 = vst.msk [vmem:[%s277 + $0x8] sm:$0xff] %vm348, %v597
        %p600 = scmp.eq.s32.totalorder %s29, 1
        // Predicated region
        $region49: #{tpu_custom_call.1} parent=35 // pred_check
          %p601 = pneg %p600
        $region50: #{tpu_custom_call.1} parent=35 // pred_check_branch
          %603 = sbr.rel (%p601) target = $region52
        $region51: #{tpu_custom_call.1} parent=35 // pred_region
          %v604 = vld [vmem:[%s277] sm:$0xff]
          %v605 = vld [vmem:[%s277 + $0x8] sm:$0xff]
          %v606 = vrsqrt.pop %v604
          %v607 = vmul.f32 %v604, %v606
          %vm608 = vcmp.eq.f32.partialorder %v604, inf
          %v609 = vsel %vm608, %v604, %v607
          %vm610 = vcmp.eq.f32.partialorder %v604, 0.0
          %v611 = vand.u32 %v604, 2147483648
          %v612 = vsel %vm610, %v611, %v609
          %v613 = vrsqrt.pop %v605
          %v614 = vmul.f32 %v605, %v613
          %vm615 = vcmp.eq.f32.partialorder %v605, inf
          %v616 = vsel %vm615, %v605, %v614
          %vm617 = vcmp.eq.f32.partialorder %v605, 0.0
          %v618 = vand.u32 %v605, 2147483648
          %v619 = vsel %vm617, %v618, %v616
          %620 = vst.msk [vmem:[%s277] sm:$0xff] %vm348, %v612
          %621 = vst.msk [vmem:[%s277 + $0x8] sm:$0xff] %vm348, %v619
        $region52: #{tpu_custom_call.1} parent=35 // pred_fallthru
          _
        %s622 = sand.u32 %s142, 1
        %s623 = scalar_lea.sflag [#allocation4], %s622
        %s624 = sand.u32 %s142, 1
        %s625 = smul.addr %s624, 16
        %s626 = scalar_lea.vmem [#allocation7], %s625
        // Predicated region
        $region53: #{tpu_custom_call.1} parent=35 // pred_check
          %p627 = pneg %p152
        $region54: #{tpu_custom_call.1} parent=35 // pred_check_branch
          %629 = sbr.rel (%p627) target = $region56
        $region55: #{tpu_custom_call.1} parent=35 // pred_region
          %s631 = ssub.s32 256, 256
          %632 = vsyncadd %s623, %s631
          %s633 = smul.addr %s28, 2
          %s634 = smul.addr %s633, 128
          %s635 = scalar_lea.hbm %s4, %s634
          %s636 = sshll.u32 %s626, 4
          %s637 = int_to_ptr.vmem [resolvable:$true] %s636
          %642 = dma.vmem_to_hbm [thread:$0]  %s637, 256, %s635, %s623, 128, 128, 8
        $region56: #{tpu_custom_call.1} parent=35 // pred_fallthru
          _
      $region36: #{tpu_custom_call.1} parent=5 // pred_fallthru
        _
      %p643 = scmp.le.s32.totalorder 2, %s19
      // Predicated region
      $region57: #{tpu_custom_call.1} parent=5 // pred_check
        %p644 = pneg %p643
      $region58: #{tpu_custom_call.1} parent=5 // pred_check_branch
        %646 = sbr.rel (%p644) target = $region60
      $region59: #{tpu_custom_call.1} parent=5 // pred_region
        %s647 = ssub.s32 %s19, 2
        // Predicated region
        $region61: #{tpu_custom_call.1} parent=59 // pred_check
          %p648 = pneg %p158
        $region62: #{tpu_custom_call.1} parent=59 // pred_check_branch
          %650 = sbr.rel (%p648) target = $region64
        $region63: #{tpu_custom_call.1} parent=59 // pred_region
          %s651 = sand.u32 %s143, 1
          %s652 = scalar_lea.sflag [#allocation4], %s651
          %s653 = sand.u32 %s143, 1
          %s654 = smul.addr %s653, 16
          %s655 = scalar_lea.vmem [#allocation7], %s654
          %656 = dma.done %s652, 256
        $region64: #{tpu_custom_call.1} parent=59 // pred_fallthru
          _
      $region60: #{tpu_custom_call.1} parent=5 // pred_fallthru
        _
    $region6: #{tpu_custom_call.1} parent=1 // loop_footer
      %s23 = sadd.s32 1, %s19
    $region7: #{tpu_custom_call.1} parent=1 // loop_footer_branch
      %18 = sbr.rel target = $region3
    $region8: #{tpu_custom_call.1} parent=1 // loop_exit
      _
    %657 = vsyncpa [#allocation3], 1
    %s658 = scalar_lea.sflag [#allocation3], 1
    %659 = vsyncpa %s658, 1
    %660 = vsyncpa [#allocation6], 1
    %s661 = scalar_lea.sflag [#allocation6], 1
    %662 = vsyncpa %s661, 1
    %663 = vsyncpa [#allocation4], 1
    %s664 = scalar_lea.sflag [#allocation4], 1
    %665 = vsyncpa %s664, 1

</llo_original>
